<compile_context>
chip_gen: v6e
topology: v6e:2x2x1
jax: 0.10.0
libtpu: 0.0.40
codegen_flags: <defaults>
</compile_context>

<pallas_src>
import math
import functools

import jax
import jax.numpy as jnp
from jax.experimental import pallas as pl
from jax.experimental.pallas import tpu as pltpu


# ---------------------------------------------------------------------------
# Fused kernel: one grid step = (sample n, channel-quarter q)
#   1) 1x1 conv (residual rows + 3 subset rows) as ONE fat lane-dense MXU matmul
#      into a VMEM scratch (weights resident across the whole grid).
#   2) graph mixing: per time step, the 3 subsets are folded into a single
#      (oc/4, 75) @ (75, 25) MXU matmul.
#   3) epilogue: gate * BN-scale, BN bias, residual add, ReLU -> only HBM write.
# ---------------------------------------------------------------------------
def _mixformer_kernel(x_ref, w_ref, b_ref, a_ref, sc_ref, bi_ref, o_ref, mm_ref,
                      *, oc4, T, V):
    q = pl.program_id(1)                       # channel-quarter index
    w_q = w_ref[q]                             # (4*oc4, C): rows = [res | k0 | k1 | k2]
    b_q = b_ref[q]                             # (4*oc4, 1)

    # 1x1 conv for this (sample, quarter), lane-dense over T*V lanes.
    mm_ref[...] = (jnp.dot(w_q, x_ref[0], preferred_element_type=jnp.float32)
                   + b_q)

    a_cat = a_ref[0, 0]                        # (3*V, V) stacked subset attention
    g = sc_ref[0, 0]                           # (oc4, 1) gate * BN scale (per sample)
    beta = bi_ref[0]                           # (oc4, 1) BN bias

    # TODO(synk): for very large T this static loop should become a T-chunked grid
    # axis / fori_loop; all slices below are static and VMEM-only.
    for t in range(T):
        blk = mm_ref[:, t * V:(t + 1) * V]     # (4*oc4, V) for this time step
        res_t = blk[:oc4]                      # residual (down-conv) rows
        lhs = jnp.concatenate(                 # fold the 3 subsets -> K = 75
            [blk[oc4:2 * oc4], blk[2 * oc4:3 * oc4], blk[3 * oc4:4 * oc4]],
            axis=1)                            # (oc4, 3*V)
        y = jnp.dot(lhs, a_cat, preferred_element_type=jnp.float32)   # (oc4, V)
        o_ref[0, :, t, :] = jnp.maximum(y * g + beta + res_t, 0.0)


def fused_mixformer(x_flat, wq, bq, a_cat, scale, bias, *, oc, T, V):
    # x_flat: (N, C, T*V)      wq: (4, oc, C)   bq: (4, oc, 1)
    # a_cat:  (N, 4, 3V, V)    scale: (N, 4, oc/4, 1)   bias: (4, oc/4, 1)
    N, C, TV = x_flat.shape
    ns = 3
    oc4 = oc // 4
    kern = functools.partial(_mixformer_kernel, oc4=oc4, T=T, V=V)

    flops = 2 * N * 4 * oc * C * T * V + 2 * N * ns * oc * T * V * V
    bytes_accessed = 4 * (x_flat.size + wq.size + bq.size + a_cat.size
                          + scale.size + bias.size + N * oc * T * V)
    # VMEM: x block (x2 buf) + resident weights + mm scratch + padded out block (x2).
    vmem_est = 4 * (2 * C * TV + wq.size + bq.size + oc * TV
                    + 2 * oc4 * T * 128) + (2 << 20)
    vmem_limit = int(min(48 * 1024 * 1024, max(16 * 1024 * 1024, vmem_est)))

    return pl.pallas_call(
        kern,
        out_shape=jax.ShapeDtypeStruct((N, oc, T, V), jnp.float32),
        grid=(N, 4),
        in_specs=[
            pl.BlockSpec((1, C, TV), lambda n, q: (n, 0, 0)),     # x: once per sample
            pl.BlockSpec((4, oc, C), lambda n, q: (0, 0, 0)),     # weights resident
            pl.BlockSpec((4, oc, 1), lambda n, q: (0, 0, 0)),     # bias resident
            pl.BlockSpec((1, 1, ns * V, V), lambda n, q: (n, q, 0, 0)),
            pl.BlockSpec((1, 1, oc4, 1), lambda n, q: (n, q, 0, 0)),
            pl.BlockSpec((1, oc4, 1), lambda n, q: (q, 0, 0)),
        ],
        out_specs=pl.BlockSpec((1, oc4, T, V), lambda n, q: (n, q, 0, 0)),
        scratch_shapes=[pltpu.VMEM((oc, TV), jnp.float32)],
        compiler_params=pltpu.CompilerParams(
            dimension_semantics=("parallel", "parallel"),
            vmem_limit_bytes=vmem_limit,
        ),
        cost_estimate=pl.CostEstimate(
            flops=int(flops), transcendentals=0, bytes_accessed=int(bytes_accessed)),
    )(x_flat, wq, bq, a_cat, scale, bias)


# ---------------------------------------------------------------------------
# Forward pass: tiny 25x25 attention / gate glue in plain JAX, heavy math in
# the fused Pallas kernel.
# ---------------------------------------------------------------------------
@functools.partial(jax.jit, static_argnames=("out_channels", "groups"))
def spatial_mixformer_forward(x0, params, *, out_channels, groups=8):
    N, C, T, V = x0.shape
    oc = out_channels
    ns = 3
    oc4 = oc // 4
    oc8 = oc4 // 2
    eps = 1e-5
    assert V == 25 and oc % 8 == 0

    # ---- fold the residual `down` projection (+ eval BN) into the conv rows ----
    if C == oc:
        w_res = jnp.eye(oc, dtype=jnp.float32)          # self.down = identity
        b_res = jnp.zeros((oc,), jnp.float32)
    else:
        s = 1.0 / math.sqrt(1.0 + eps)                  # down BN (eval mode) folded
        w_res = params["down_w"] * s
        b_res = params["down_b"] * s

    conv_w = params["conv_w"]                           # (3*oc, C)
    conv_b = params["conv_b"]                           # (3*oc,)

    # quarter-major weight stack: per quarter rows = [res | subset0 | subset1 | subset2]
    wq = jnp.concatenate(
        [w_res.reshape(4, 1, oc4, C),
         conv_w.reshape(ns, 4, oc4, C).transpose(1, 0, 2, 3)], axis=1
    ).reshape(4, oc, C)
    bq = jnp.concatenate(
        [b_res.reshape(4, 1, oc4),
         conv_b.reshape(ns, 4, oc4).transpose(1, 0, 2)], axis=1
    ).reshape(4, oc)[:, :, None]

    # ---- sum_t conv(x) == conv(sum_t x) for a 1x1 conv: all pooled statistics
    #      for the attention / gate come from this tiny tensor (m is never read).
    xs = x0.sum(axis=2)                                              # (N, C, V)
    tsum = jnp.einsum("ki,niv->nkv", conv_w, xs) + T * conv_b[None, :, None]
    tsum5 = tsum.reshape(N, ns, 4, oc4, V)                           # (N,3,4,oc/4,V)

    pools = tsum5.reshape(N, ns, 4, 2, oc8, V).mean(axis=4) / T      # (N,3,4,2,V)
    Qp = pools[:, :, :, 0, :]
    Kp = pools[:, :, :, 1, :]

    def lin_relu(x, w, b):                     # torch nn.Linear: x @ w.T + b
        return jnp.maximum(x @ w.T + b, 0.0)

    QS = lin_relu(Qp, params["spaatt_lin_w"], params["spaatt_lin_b"])
    KS = lin_relu(Kp, params["spaatt_lin_w"], params["spaatt_lin_b"])
    QL = lin_relu(Qp, params["lin_w"], params["lin_b"])
    KL = lin_relu(Kp, params["lin_w"], params["lin_b"])

    att = jax.nn.softmax(QS[..., :, None] * KS[..., None, :], axis=-1)  # (N,3,4,V,V)
    cross = [jax.nn.softmax(KL[:, :, j, :, None] * QL[:, :, j + 1, None, :], axis=-1)
             for j in range(3)]                                          # (N,3,V,V)
    comb = jnp.stack([
        att[:, :, 0] / 2 + cross[0] / 4,
        att[:, :, 1] / 2 + cross[0] / 4 + cross[1] / 4,
        att[:, :, 2] / 2 + cross[1] / 4 + cross[2] / 4,
        att[:, :, 3] / 2 + cross[2] / 4,
    ], axis=2)                                                           # (N,3,4,V,V)

    # A_SE + A_GEME == 2*A per channel under the deterministic, group-uniform init.
    A_small = comb * 0.5 + 2.0 * params["A"][None, :, None, :, :]        # (N,3,4,V,V)
    # stack subsets along the contraction axis for the folded K=75 matmul
    A_cat = A_small.transpose(0, 2, 1, 3, 4).reshape(N, 4, ns * V, V)

    # ---- channel refinement gate: avgpool(einsum(m, A)) == (sum_t m).(sum_w A)/(T*V)
    arow = jnp.sum(A_small, axis=-1)                                     # (N,3,4,V)
    p = jnp.einsum("nkqcv,nkqv->nqc", tsum5, arow).reshape(N, oc) / (T * V)
    w1d = params["charef_w"]
    pz = jnp.pad(p, ((0, 0), (1, 1)))
    cr = w1d[0] * pz[:, :-2] + w1d[1] * pz[:, 1:-1] + w1d[2] * pz[:, 2:]
    gate = 1.0 + jax.nn.sigmoid(cr)                                      # (N, oc)

    # ---- main BatchNorm (eval mode) folded into per-channel scale / bias ----------
    inv_std = params["bn_gamma"] / jnp.sqrt(params["bn_var"] + eps)
    scale = (gate * inv_std[None, :]).reshape(N, 4, oc4, 1)
    bias = (params["bn_beta"] - params["bn_mean"] * inv_std).reshape(4, oc4, 1)

    x_flat = x0.reshape(N, C, T * V)
    return fused_mixformer(x_flat, wq, bq, A_cat, scale, bias, oc=oc, T=T, V=V)


# ---------------------------------------------------------------------------
# Plain-JAX reference (mirrors the PyTorch forward, eval-mode BN, same
# group-uniform A init) used only for the numerical self-check in __main__.
# ---------------------------------------------------------------------------
def reference_forward(x0, params, *, out_channels, groups=8):
    N, C, T, V = x0.shape
    oc = out_channels
    ns = 3
    oc4 = oc // 4
    oc8 = oc4 // 2
    eps = 1e-5

    def lin_relu(x, w, b):
        return jnp.maximum(x @ w.T + b, 0.0)

    m = (jnp.einsum("ki,nitv->nktv", params["conv_w"], x0)
         + params["conv_b"][None, :, None, None]).reshape(N, ns, oc, T, V)

    A_final = []
    for i in range(ns):
        attens, Qs, Ks = [], [], []
        for j in range(4):
            xq = m[:, i, j * oc4:(j + 1) * oc4]
            Qo = xq[:, :oc8].mean(axis=(1, 2))
            Ko = xq[:, oc8:].mean(axis=(1, 2))
            Qs.append(Qo)
            Ks.append(Ko)
            QS = lin_relu(Qo, params["spaatt_lin_w"], params["spaatt_lin_b"])
            KS = lin_relu(Ko, params["spaatt_lin_w"], params["spaatt_lin_b"])
            attens.append(jax.nn.softmax(QS[:, :, None] * KS[:, None, :], axis=-1))
        crosses = []
        for j in range(3):
            Kl = lin_relu(Ks[j], params["lin_w"], params["lin_b"])
            Ql = lin_relu(Qs[j + 1], params["lin_w"], params["lin_b"])
            crosses.append(jax.nn.softmax(Kl[:, :, None] * Ql[:, None, :], axis=-1))
        m1 = attens[0] / 2 + crosses[0] / 4
        m2 = attens[1] / 2 + crosses[0] / 4 + crosses[1] / 4
        m3 = attens[2] / 2 + crosses[1] / 4 + crosses[2] / 4
        m4 = attens[3] / 2 + crosses[2] / 4
        att_full = jnp.concatenate(
            [jnp.repeat(a[:, None], oc4, axis=1) for a in (m1, m2, m3, m4)], axis=1)
        norm_A_i = jnp.repeat(2.0 * params["A"][i][None], oc, axis=0)
        A_final.append(att_full * 0.5 + norm_A_i[None])
    A_final = jnp.stack(A_final, axis=1)                                 # (N,3,oc,V,V)

    mo = jnp.einsum("nkctv,nkcvw->nctw", m, A_final)                     # (N,oc,T,V)
    CR = mo.mean(axis=(2, 3))
    w1d = params["charef_w"]
    pz = jnp.pad(CR, ((0, 0), (1, 1)))
    cr = w1d[0] * pz[:, :-2] + w1d[1] * pz[:, 1:-1] + w1d[2] * pz[:, 2:]
    gate = 1.0 + jax.nn.sigmoid(cr)
    CR_out = mo * gate[:, :, None, None]
    inv_std = params["bn_gamma"] / jnp.sqrt(params["bn_var"] + eps)
    out = (CR_out * inv_std[None, :, None, None]
           + (params["bn_beta"] - params["bn_mean"] * inv_std)[None, :, None, None])
    if C == oc:
        down = x0
    else:
        s = 1.0 / math.sqrt(1.0 + eps)
        down = (jnp.einsum("oi,nitv->notv", params["down_w"], x0)
                + params["down_b"][None, :, None, None]) * s
    return jnp.maximum(out + down, 0.0)


# ---------------------------------------------------------------------------
# Deterministic parameter initialization (shapes follow the module __init__)
# ---------------------------------------------------------------------------
def init_params(key, in_channels, out_channels, num_subset=3):
    V = 25
    ks = jax.random.split(key, 8)
    A = jax.random.uniform(ks[0], (num_subset, V, V), jnp.float32) * 0.1
    kc = out_channels * num_subset
    conv_w = jax.random.normal(ks[1], (kc, in_channels), jnp.float32) * math.sqrt(2.0 / kc)
    conv_b = jnp.zeros((kc,), jnp.float32)                     # conv_init -> bias 0
    down_w = jax.random.normal(ks[2], (out_channels, in_channels), jnp.float32) \
        * math.sqrt(2.0 / out_channels)
    down_b = jnp.zeros((out_channels,), jnp.float32)
    lin_w = jax.random.normal(ks[3], (V, V), jnp.float32) * (1.0 / math.sqrt(V))
    lin_b = jax.random.normal(ks[4], (V,), jnp.float32) * 0.01
    spaatt_lin_w = jax.random.normal(ks[5], (V, V), jnp.float32) * (1.0 / math.sqrt(V))
    spaatt_lin_b = jax.random.normal(ks[6], (V,), jnp.float32) * 0.01
    charef_w = jax.random.normal(ks[7], (3,), jnp.float32) * 0.5
    return dict(
        A=A, conv_w=conv_w, conv_b=conv_b,
        down_w=down_w, down_b=down_b,
        lin_w=lin_w, lin_b=lin_b,
        spaatt_lin_w=spaatt_lin_w, spaatt_lin_b=spaatt_lin_b,
        charef_w=charef_w,
        bn_gamma=jnp.full((out_channels,), 1e-6, jnp.float32),  # bn_init(self.bn, 1e-6)
        bn_beta=jnp.zeros((out_channels,), jnp.float32),
        bn_mean=jnp.zeros((out_channels,), jnp.float32),
        bn_var=jnp.ones((out_channels,), jnp.float32),
    )


if __name__ == "__main__":
    key = jax.random.PRNGKey(0)
    kx, kp = jax.random.split(key)
    N, C, T, V = 2, 4, 8, 25            # V must be 25 (Linear(25, 25) in the module)
    out_channels = 32                    # divisible by 8 (4 quarters x Q/K halves)
    x0 = jax.random.normal(kx, (N, C, T, V), jnp.float32)
    params = init_params(kp, C, out_channels)

    # Numerical self-check against the plain-JAX reference.  BN gamma is overridden
    # to 1.0 here so the attention / graph-matmul path is numerically visible (the
    # module-faithful init uses 1e-6, which would hide it under the residual).
    params_chk = dict(params)
    params_chk["bn_gamma"] = jnp.ones((out_channels,), jnp.float32)
    got = spatial_mixformer_forward(x0, params_chk, out_channels=out_channels)
    ref = reference_forward(x0, params_chk, out_channels=out_channels)
    got, ref = jax.block_until_ready((got, ref))
    assert got.shape == (N, out_channels, T, V)
    max_err = float(jnp.max(jnp.abs(got - ref)))
    assert max_err < 5e-2, f"kernel mismatch vs reference: max |err| = {max_err}"

    # Module-faithful init run.
    out = spatial_mixformer_forward(x0, params, out_channels=out_channels)
    out = jax.block_until_ready(out)
    assert out.shape == (N, out_channels, T, V)
    assert bool(jnp.all(out >= 0.0))     # ReLU output
    print("KERNEL_OK")
</pallas_src>

<mosaic_0001>
module attributes {stable_mosaic.version = 11 : i64} {
  func.func @_mixformer_kernel(%arg0: i32, %arg1: i32, %arg2: memref<1x4x200xf32, #tpu.memory_space<vmem>>, %arg3: memref<4x32x4xf32, #tpu.memory_space<vmem>>, %arg4: memref<4x32x1xf32, #tpu.memory_space<vmem>>, %arg5: memref<1x1x75x25xf32, #tpu.memory_space<vmem>>, %arg6: memref<1x1x8x1xf32, #tpu.memory_space<vmem>>, %arg7: memref<1x8x1xf32, #tpu.memory_space<vmem>>, %arg8: memref<1x8x8x25xf32, #tpu.memory_space<vmem>>, %arg9: memref<32x200xf32, #tpu.memory_space<vmem>>) attributes {dimension_semantics = [#tpu.dimension_semantics<parallel>, #tpu.dimension_semantics<parallel>], iteration_bounds = array<i64: 2, 4>, scalar_prefetch = 0 : i64, scratch_operands = 1 : i64, tpu.core_type = #tpu.core_type<tc>, window_params = [{transform_indices = @transform_0, window_bounds = array<i64: 1, 4, 200>}, {pipeline_mode = #tpu.pipeline_mode<synchronous>, transform_indices = @transform_1, window_bounds = array<i64: 4, 32, 4>}, {pipeline_mode = #tpu.pipeline_mode<synchronous>, transform_indices = @transform_2, window_bounds = array<i64: 4, 32, 1>}, {transform_indices = @transform_3, window_bounds = array<i64: 1, 1, 75, 25>}, {transform_indices = @transform_4, window_bounds = array<i64: 1, 1, 8, 1>}, {transform_indices = @transform_5, window_bounds = array<i64: 1, 8, 1>}, {transform_indices = @transform_6, window_bounds = array<i64: 1, 8, 8, 25>}]} {
    %0 = arith.index_cast %arg1 : i32 to index
    %c0 = arith.constant 0 : index
    %c0_0 = arith.constant 0 : index
    %1 = vector.load %arg3[%0, %c0, %c0_0] : memref<4x32x4xf32, #tpu.memory_space<vmem>>, vector<1x32x4xf32>
    %2 = vector.shape_cast %1 : vector<1x32x4xf32> to vector<32x4xf32>
    %3 = arith.index_cast %arg1 : i32 to index
    %c0_1 = arith.constant 0 : index
    %c0_2 = arith.constant 0 : index
    %4 = vector.load %arg4[%3, %c0_1, %c0_2] : memref<4x32x1xf32, #tpu.memory_space<vmem>>, vector<1x32x1xf32>
    %5 = vector.shape_cast %4 : vector<1x32x1xf32> to vector<32x1xf32>
    %c0_3 = arith.constant 0 : index
    %c0_4 = arith.constant 0 : index
    %c0_5 = arith.constant 0 : index
    %6 = vector.load %arg2[%c0_3, %c0_4, %c0_5] : memref<1x4x200xf32, #tpu.memory_space<vmem>>, vector<1x4x200xf32>
    %7 = vector.shape_cast %6 : vector<1x4x200xf32> to vector<4x200xf32>
    %cst = arith.constant dense<0.000000e+00> : vector<32x200xf32>
    %8 = tpu.matmul %2, %7, %cst {dimension_numbers = #tpu.dot_dimension_numbers<[1], [0], [0], [1], [0, 0, 1, 1], [], []>} : vector<32x4xf32>, vector<4x200xf32>, vector<32x200xf32> -> vector<32x200xf32>
    %9 = vector.broadcast %5 : vector<32x1xf32> to vector<32x200xf32>
    %10 = arith.addf %8, %9 : vector<32x200xf32>
    %c0_6 = arith.constant 0 : index
    %c0_7 = arith.constant 0 : index
    %11 = vector.load %arg9[%c0_6, %c0_7] : memref<32x200xf32, #tpu.memory_space<vmem>>, vector<32x200xf32>
    tpu.vector_store %arg9[%c0_6, %c0_7], %10 {strides = array<i32>} : memref<32x200xf32, #tpu.memory_space<vmem>>, vector<32x200xf32>,
    %c0_8 = arith.constant 0 : index
    %c0_9 = arith.constant 0 : index
    %c0_10 = arith.constant 0 : index
    %c0_11 = arith.constant 0 : index
    %12 = vector.load %arg5[%c0_8, %c0_9, %c0_10, %c0_11] : memref<1x1x75x25xf32, #tpu.memory_space<vmem>>, vector<1x1x75x25xf32>
    %13 = vector.shape_cast %12 : vector<1x1x75x25xf32> to vector<75x25xf32>
    %c0_12 = arith.constant 0 : index
    %c0_13 = arith.constant 0 : index
    %c0_14 = arith.constant 0 : index
    %c0_15 = arith.constant 0 : index
    %14 = vector.load %arg6[%c0_12, %c0_13, %c0_14, %c0_15] : memref<1x1x8x1xf32, #tpu.memory_space<vmem>>, vector<1x1x8x1xf32>
    %15 = vector.shape_cast %14 : vector<1x1x8x1xf32> to vector<8x1xf32>
    %c0_16 = arith.constant 0 : index
    %c0_17 = arith.constant 0 : index
    %c0_18 = arith.constant 0 : index
    %16 = vector.load %arg7[%c0_16, %c0_17, %c0_18] : memref<1x8x1xf32, #tpu.memory_space<vmem>>, vector<1x8x1xf32>
    %17 = vector.shape_cast %16 : vector<1x8x1xf32> to vector<8x1xf32>
    %c0_19 = arith.constant 0 : index
    %c0_20 = arith.constant 0 : index
    %18 = vector.load %arg9[%c0_19, %c0_20] : memref<32x200xf32, #tpu.memory_space<vmem>>, vector<32x25xf32>
    %19 = vector.extract_strided_slice %18 {offsets = [0, 0], sizes = [8, 25], strides = [1, 1]} : vector<32x25xf32> to vector<8x25xf32>
    %20 = vector.extract_strided_slice %18 {offsets = [8, 0], sizes = [8, 25], strides = [1, 1]} : vector<32x25xf32> to vector<8x25xf32>
    %21 = vector.extract_strided_slice %18 {offsets = [16, 0], sizes = [8, 25], strides = [1, 1]} : vector<32x25xf32> to vector<8x25xf32>
    %22 = vector.extract_strided_slice %18 {offsets = [24, 0], sizes = [8, 25], strides = [1, 1]} : vector<32x25xf32> to vector<8x25xf32>
    %23 = tpu.concatenate %20, %21, %22 in 1 : vector<8x25xf32>, vector<8x25xf32>, vector<8x25xf32> -> vector<8x75xf32>
    %cst_21 = arith.constant dense<0.000000e+00> : vector<8x25xf32>
    %24 = tpu.matmul %23, %13, %cst_21 {dimension_numbers = #tpu.dot_dimension_numbers<[1], [0], [0], [1], [0, 0, 1, 1], [], []>} : vector<8x75xf32>, vector<75x25xf32>, vector<8x25xf32> -> vector<8x25xf32>
    %25 = vector.broadcast %15 : vector<8x1xf32> to vector<8x25xf32>
    %26 = arith.mulf %24, %25 : vector<8x25xf32>
    %27 = vector.broadcast %17 : vector<8x1xf32> to vector<8x25xf32>
    %28 = arith.addf %26, %27 : vector<8x25xf32>
    %29 = arith.addf %28, %19 : vector<8x25xf32>
    %cst_22 = arith.constant 0.000000e+00 : f32
    %30 = vector.broadcast %cst_22 : f32 to vector<8x25xf32>
    %31 = arith.maximumf %29, %30 : vector<8x25xf32>
    %c0_23 = arith.constant 0 : index
    %c0_24 = arith.constant 0 : index
    %c0_25 = arith.constant 0 : index
    %c0_26 = arith.constant 0 : index
    %32 = vector.load %arg8[%c0_23, %c0_24, %c0_25, %c0_26] : memref<1x8x8x25xf32, #tpu.memory_space<vmem>>, vector<1x8x1x25xf32>
    %33 = vector.shape_cast %32 : vector<1x8x1x25xf32> to vector<8x25xf32>
    %34 = vector.shape_cast %31 : vector<8x25xf32> to vector<1x8x1x25xf32>
    tpu.vector_store %arg8[%c0_23, %c0_24, %c0_25, %c0_26], %34 {strides = array<i32>} : memref<1x8x8x25xf32, #tpu.memory_space<vmem>>, vector<1x8x1x25xf32>,
    %c0_27 = arith.constant 0 : index
    %c25 = arith.constant 25 : index
    %35 = vector.load %arg9[%c0_27, %c25] : memref<32x200xf32, #tpu.memory_space<vmem>>, vector<32x25xf32>
    %36 = vector.extract_strided_slice %35 {offsets = [0, 0], sizes = [8, 25], strides = [1, 1]} : vector<32x25xf32> to vector<8x25xf32>
    %37 = vector.extract_strided_slice %35 {offsets = [8, 0], sizes = [8, 25], strides = [1, 1]} : vector<32x25xf32> to vector<8x25xf32>
    %38 = vector.extract_strided_slice %35 {offsets = [16, 0], sizes = [8, 25], strides = [1, 1]} : vector<32x25xf32> to vector<8x25xf32>
    %39 = vector.extract_strided_slice %35 {offsets = [24, 0], sizes = [8, 25], strides = [1, 1]} : vector<32x25xf32> to vector<8x25xf32>
    %40 = tpu.concatenate %37, %38, %39 in 1 : vector<8x25xf32>, vector<8x25xf32>, vector<8x25xf32> -> vector<8x75xf32>
    %cst_28 = arith.constant dense<0.000000e+00> : vector<8x25xf32>
    %41 = tpu.matmul %40, %13, %cst_28 {dimension_numbers = #tpu.dot_dimension_numbers<[1], [0], [0], [1], [0, 0, 1, 1], [], []>} : vector<8x75xf32>, vector<75x25xf32>, vector<8x25xf32> -> vector<8x25xf32>
    %42 = vector.broadcast %15 : vector<8x1xf32> to vector<8x25xf32>
    %43 = arith.mulf %41, %42 : vector<8x25xf32>
    %44 = vector.broadcast %17 : vector<8x1xf32> to vector<8x25xf32>
    %45 = arith.addf %43, %44 : vector<8x25xf32>
    %46 = arith.addf %45, %36 : vector<8x25xf32>
    %cst_29 = arith.constant 0.000000e+00 : f32
    %47 = vector.broadcast %cst_29 : f32 to vector<8x25xf32>
    %48 = arith.maximumf %46, %47 : vector<8x25xf32>
    %c0_30 = arith.constant 0 : index
    %c0_31 = arith.constant 0 : index
    %c1 = arith.constant 1 : index
    %c0_32 = arith.constant 0 : index
    %49 = vector.load %arg8[%c0_30, %c0_31, %c1, %c0_32] : memref<1x8x8x25xf32, #tpu.memory_space<vmem>>, vector<1x8x1x25xf32>
    %50 = vector.shape_cast %49 : vector<1x8x1x25xf32> to vector<8x25xf32>
    %51 = vector.shape_cast %48 : vector<8x25xf32> to vector<1x8x1x25xf32>
    tpu.vector_store %arg8[%c0_30, %c0_31, %c1, %c0_32], %51 {strides = array<i32>} : memref<1x8x8x25xf32, #tpu.memory_space<vmem>>, vector<1x8x1x25xf32>,
    %c0_33 = arith.constant 0 : index
    %c50 = arith.constant 50 : index
    %52 = vector.load %arg9[%c0_33, %c50] : memref<32x200xf32, #tpu.memory_space<vmem>>, vector<32x25xf32>
    %53 = vector.extract_strided_slice %52 {offsets = [0, 0], sizes = [8, 25], strides = [1, 1]} : vector<32x25xf32> to vector<8x25xf32>
    %54 = vector.extract_strided_slice %52 {offsets = [8, 0], sizes = [8, 25], strides = [1, 1]} : vector<32x25xf32> to vector<8x25xf32>
    %55 = vector.extract_strided_slice %52 {offsets = [16, 0], sizes = [8, 25], strides = [1, 1]} : vector<32x25xf32> to vector<8x25xf32>
    %56 = vector.extract_strided_slice %52 {offsets = [24, 0], sizes = [8, 25], strides = [1, 1]} : vector<32x25xf32> to vector<8x25xf32>
    %57 = tpu.concatenate %54, %55, %56 in 1 : vector<8x25xf32>, vector<8x25xf32>, vector<8x25xf32> -> vector<8x75xf32>
    %cst_34 = arith.constant dense<0.000000e+00> : vector<8x25xf32>
    %58 = tpu.matmul %57, %13, %cst_34 {dimension_numbers = #tpu.dot_dimension_numbers<[1], [0], [0], [1], [0, 0, 1, 1], [], []>} : vector<8x75xf32>, vector<75x25xf32>, vector<8x25xf32> -> vector<8x25xf32>
    %59 = vector.broadcast %15 : vector<8x1xf32> to vector<8x25xf32>
    %60 = arith.mulf %58, %59 : vector<8x25xf32>
    %61 = vector.broadcast %17 : vector<8x1xf32> to vector<8x25xf32>
    %62 = arith.addf %60, %61 : vector<8x25xf32>
    %63 = arith.addf %62, %53 : vector<8x25xf32>
    %cst_35 = arith.constant 0.000000e+00 : f32
    %64 = vector.broadcast %cst_35 : f32 to vector<8x25xf32>
    %65 = arith.maximumf %63, %64 : vector<8x25xf32>
    %c0_36 = arith.constant 0 : index
    %c0_37 = arith.constant 0 : index
    %c2 = arith.constant 2 : index
    %c0_38 = arith.constant 0 : index
    %66 = vector.load %arg8[%c0_36, %c0_37, %c2, %c0_38] : memref<1x8x8x25xf32, #tpu.memory_space<vmem>>, vector<1x8x1x25xf32>
    %67 = vector.shape_cast %66 : vector<1x8x1x25xf32> to vector<8x25xf32>
    %68 = vector.shape_cast %65 : vector<8x25xf32> to vector<1x8x1x25xf32>
    tpu.vector_store %arg8[%c0_36, %c0_37, %c2, %c0_38], %68 {strides = array<i32>} : memref<1x8x8x25xf32, #tpu.memory_space<vmem>>, vector<1x8x1x25xf32>,
    %c0_39 = arith.constant 0 : index
    %c75 = arith.constant 75 : index
    %69 = vector.load %arg9[%c0_39, %c75] : memref<32x200xf32, #tpu.memory_space<vmem>>, vector<32x25xf32>
    %70 = vector.extract_strided_slice %69 {offsets = [0, 0], sizes = [8, 25], strides = [1, 1]} : vector<32x25xf32> to vector<8x25xf32>
    %71 = vector.extract_strided_slice %69 {offsets = [8, 0], sizes = [8, 25], strides = [1, 1]} : vector<32x25xf32> to vector<8x25xf32>
    %72 = vector.extract_strided_slice %69 {offsets = [16, 0], sizes = [8, 25], strides = [1, 1]} : vector<32x25xf32> to vector<8x25xf32>
    %73 = vector.extract_strided_slice %69 {offsets = [24, 0], sizes = [8, 25], strides = [1, 1]} : vector<32x25xf32> to vector<8x25xf32>
    %74 = tpu.concatenate %71, %72, %73 in 1 : vector<8x25xf32>, vector<8x25xf32>, vector<8x25xf32> -> vector<8x75xf32>
    %cst_40 = arith.constant dense<0.000000e+00> : vector<8x25xf32>
    %75 = tpu.matmul %74, %13, %cst_40 {dimension_numbers = #tpu.dot_dimension_numbers<[1], [0], [0], [1], [0, 0, 1, 1], [], []>} : vector<8x75xf32>, vector<75x25xf32>, vector<8x25xf32> -> vector<8x25xf32>
    %76 = vector.broadcast %15 : vector<8x1xf32> to vector<8x25xf32>
    %77 = arith.mulf %75, %76 : vector<8x25xf32>
    %78 = vector.broadcast %17 : vector<8x1xf32> to vector<8x25xf32>
    %79 = arith.addf %77, %78 : vector<8x25xf32>
    %80 = arith.addf %79, %70 : vector<8x25xf32>
    %cst_41 = arith.constant 0.000000e+00 : f32
    %81 = vector.broadcast %cst_41 : f32 to vector<8x25xf32>
    %82 = arith.maximumf %80, %81 : vector<8x25xf32>
    %c0_42 = arith.constant 0 : index
    %c0_43 = arith.constant 0 : index
    %c3 = arith.constant 3 : index
    %c0_44 = arith.constant 0 : index
    %83 = vector.load %arg8[%c0_42, %c0_43, %c3, %c0_44] : memref<1x8x8x25xf32, #tpu.memory_space<vmem>>, vector<1x8x1x25xf32>
    %84 = vector.shape_cast %83 : vector<1x8x1x25xf32> to vector<8x25xf32>
    %85 = vector.shape_cast %82 : vector<8x25xf32> to vector<1x8x1x25xf32>
    tpu.vector_store %arg8[%c0_42, %c0_43, %c3, %c0_44], %85 {strides = array<i32>} : memref<1x8x8x25xf32, #tpu.memory_space<vmem>>, vector<1x8x1x25xf32>,
    %c0_45 = arith.constant 0 : index
    %c100 = arith.constant 100 : index
    %86 = vector.load %arg9[%c0_45, %c100] : memref<32x200xf32, #tpu.memory_space<vmem>>, vector<32x25xf32>
    %87 = vector.extract_strided_slice %86 {offsets = [0, 0], sizes = [8, 25], strides = [1, 1]} : vector<32x25xf32> to vector<8x25xf32>
    %88 = vector.extract_strided_slice %86 {offsets = [8, 0], sizes = [8, 25], strides = [1, 1]} : vector<32x25xf32> to vector<8x25xf32>
    %89 = vector.extract_strided_slice %86 {offsets = [16, 0], sizes = [8, 25], strides = [1, 1]} : vector<32x25xf32> to vector<8x25xf32>
    %90 = vector.extract_strided_slice %86 {offsets = [24, 0], sizes = [8, 25], strides = [1, 1]} : vector<32x25xf32> to vector<8x25xf32>
    %91 = tpu.concatenate %88, %89, %90 in 1 : vector<8x25xf32>, vector<8x25xf32>, vector<8x25xf32> -> vector<8x75xf32>
    %cst_46 = arith.constant dense<0.000000e+00> : vector<8x25xf32>
    %92 = tpu.matmul %91, %13, %cst_46 {dimension_numbers = #tpu.dot_dimension_numbers<[1], [0], [0], [1], [0, 0, 1, 1], [], []>} : vector<8x75xf32>, vector<75x25xf32>, vector<8x25xf32> -> vector<8x25xf32>
    %93 = vector.broadcast %15 : vector<8x1xf32> to vector<8x25xf32>
    %94 = arith.mulf %92, %93 : vector<8x25xf32>
    %95 = vector.broadcast %17 : vector<8x1xf32> to vector<8x25xf32>
    %96 = arith.addf %94, %95 : vector<8x25xf32>
    %97 = arith.addf %96, %87 : vector<8x25xf32>
    %cst_47 = arith.constant 0.000000e+00 : f32
    %98 = vector.broadcast %cst_47 : f32 to vector<8x25xf32>
    %99 = arith.maximumf %97, %98 : vector<8x25xf32>
    %c0_48 = arith.constant 0 : index
    %c0_49 = arith.constant 0 : index
    %c4 = arith.constant 4 : index
    %c0_50 = arith.constant 0 : index
    %100 = vector.load %arg8[%c0_48, %c0_49, %c4, %c0_50] : memref<1x8x8x25xf32, #tpu.memory_space<vmem>>, vector<1x8x1x25xf32>
    %101 = vector.shape_cast %100 : vector<1x8x1x25xf32> to vector<8x25xf32>
    %102 = vector.shape_cast %99 : vector<8x25xf32> to vector<1x8x1x25xf32>
    tpu.vector_store %arg8[%c0_48, %c0_49, %c4, %c0_50], %102 {strides = array<i32>} : memref<1x8x8x25xf32, #tpu.memory_space<vmem>>, vector<1x8x1x25xf32>,
    %c0_51 = arith.constant 0 : index
    %c125 = arith.constant 125 : index
    %103 = vector.load %arg9[%c0_51, %c125] : memref<32x200xf32, #tpu.memory_space<vmem>>, vector<32x25xf32>
    %104 = vector.extract_strided_slice %103 {offsets = [0, 0], sizes = [8, 25], strides = [1, 1]} : vector<32x25xf32> to vector<8x25xf32>
    %105 = vector.extract_strided_slice %103 {offsets = [8, 0], sizes = [8, 25], strides = [1, 1]} : vector<32x25xf32> to vector<8x25xf32>
    %106 = vector.extract_strided_slice %103 {offsets = [16, 0], sizes = [8, 25], strides = [1, 1]} : vector<32x25xf32> to vector<8x25xf32>
    %107 = vector.extract_strided_slice %103 {offsets = [24, 0], sizes = [8, 25], strides = [1, 1]} : vector<32x25xf32> to vector<8x25xf32>
    %108 = tpu.concatenate %105, %106, %107 in 1 : vector<8x25xf32>, vector<8x25xf32>, vector<8x25xf32> -> vector<8x75xf32>
    %cst_52 = arith.constant dense<0.000000e+00> : vector<8x25xf32>
    %109 = tpu.matmul %108, %13, %cst_52 {dimension_numbers = #tpu.dot_dimension_numbers<[1], [0], [0], [1], [0, 0, 1, 1], [], []>} : vector<8x75xf32>, vector<75x25xf32>, vector<8x25xf32> -> vector<8x25xf32>
    %110 = vector.broadcast %15 : vector<8x1xf32> to vector<8x25xf32>
    %111 = arith.mulf %109, %110 : vector<8x25xf32>
    %112 = vector.broadcast %17 : vector<8x1xf32> to vector<8x25xf32>
    %113 = arith.addf %111, %112 : vector<8x25xf32>
    %114 = arith.addf %113, %104 : vector<8x25xf32>
    %cst_53 = arith.constant 0.000000e+00 : f32
    %115 = vector.broadcast %cst_53 : f32 to vector<8x25xf32>
    %116 = arith.maximumf %114, %115 : vector<8x25xf32>
    %c0_54 = arith.constant 0 : index
    %c0_55 = arith.constant 0 : index
    %c5 = arith.constant 5 : index
    %c0_56 = arith.constant 0 : index
    %117 = vector.load %arg8[%c0_54, %c0_55, %c5, %c0_56] : memref<1x8x8x25xf32, #tpu.memory_space<vmem>>, vector<1x8x1x25xf32>
    %118 = vector.shape_cast %117 : vector<1x8x1x25xf32> to vector<8x25xf32>
    %119 = vector.shape_cast %116 : vector<8x25xf32> to vector<1x8x1x25xf32>
    tpu.vector_store %arg8[%c0_54, %c0_55, %c5, %c0_56], %119 {strides = array<i32>} : memref<1x8x8x25xf32, #tpu.memory_space<vmem>>, vector<1x8x1x25xf32>,
    %c0_57 = arith.constant 0 : index
    %c150 = arith.constant 150 : index
    %120 = vector.load %arg9[%c0_57, %c150] : memref<32x200xf32, #tpu.memory_space<vmem>>, vector<32x25xf32>
    %121 = vector.extract_strided_slice %120 {offsets = [0, 0], sizes = [8, 25], strides = [1, 1]} : vector<32x25xf32> to vector<8x25xf32>
    %122 = vector.extract_strided_slice %120 {offsets = [8, 0], sizes = [8, 25], strides = [1, 1]} : vector<32x25xf32> to vector<8x25xf32>
    %123 = vector.extract_strided_slice %120 {offsets = [16, 0], sizes = [8, 25], strides = [1, 1]} : vector<32x25xf32> to vector<8x25xf32>
    %124 = vector.extract_strided_slice %120 {offsets = [24, 0], sizes = [8, 25], strides = [1, 1]} : vector<32x25xf32> to vector<8x25xf32>
    %125 = tpu.concatenate %122, %123, %124 in 1 : vector<8x25xf32>, vector<8x25xf32>, vector<8x25xf32> -> vector<8x75xf32>
    %cst_58 = arith.constant dense<0.000000e+00> : vector<8x25xf32>
    %126 = tpu.matmul %125, %13, %cst_58 {dimension_numbers = #tpu.dot_dimension_numbers<[1], [0], [0], [1], [0, 0, 1, 1], [], []>} : vector<8x75xf32>, vector<75x25xf32>, vector<8x25xf32> -> vector<8x25xf32>
    %127 = vector.broadcast %15 : vector<8x1xf32> to vector<8x25xf32>
    %128 = arith.mulf %126, %127 : vector<8x25xf32>
    %129 = vector.broadcast %17 : vector<8x1xf32> to vector<8x25xf32>
    %130 = arith.addf %128, %129 : vector<8x25xf32>
    %131 = arith.addf %130, %121 : vector<8x25xf32>
    %cst_59 = arith.constant 0.000000e+00 : f32
    %132 = vector.broadcast %cst_59 : f32 to vector<8x25xf32>
    %133 = arith.maximumf %131, %132 : vector<8x25xf32>
    %c0_60 = arith.constant 0 : index
    %c0_61 = arith.constant 0 : index
    %c6 = arith.constant 6 : index
    %c0_62 = arith.constant 0 : index
    %134 = vector.load %arg8[%c0_60, %c0_61, %c6, %c0_62] : memref<1x8x8x25xf32, #tpu.memory_space<vmem>>, vector<1x8x1x25xf32>
    %135 = vector.shape_cast %134 : vector<1x8x1x25xf32> to vector<8x25xf32>
    %136 = vector.shape_cast %133 : vector<8x25xf32> to vector<1x8x1x25xf32>
    tpu.vector_store %arg8[%c0_60, %c0_61, %c6, %c0_62], %136 {strides = array<i32>} : memref<1x8x8x25xf32, #tpu.memory_space<vmem>>, vector<1x8x1x25xf32>,
    %c0_63 = arith.constant 0 : index
    %c175 = arith.constant 175 : index
    %137 = vector.load %arg9[%c0_63, %c175] : memref<32x200xf32, #tpu.memory_space<vmem>>, vector<32x25xf32>
    %138 = vector.extract_strided_slice %137 {offsets = [0, 0], sizes = [8, 25], strides = [1, 1]} : vector<32x25xf32> to vector<8x25xf32>
    %139 = vector.extract_strided_slice %137 {offsets = [8, 0], sizes = [8, 25], strides = [1, 1]} : vector<32x25xf32> to vector<8x25xf32>
    %140 = vector.extract_strided_slice %137 {offsets = [16, 0], sizes = [8, 25], strides = [1, 1]} : vector<32x25xf32> to vector<8x25xf32>
    %141 = vector.extract_strided_slice %137 {offsets = [24, 0], sizes = [8, 25], strides = [1, 1]} : vector<32x25xf32> to vector<8x25xf32>
    %142 = tpu.concatenate %139, %140, %141 in 1 : vector<8x25xf32>, vector<8x25xf32>, vector<8x25xf32> -> vector<8x75xf32>
    %cst_64 = arith.constant dense<0.000000e+00> : vector<8x25xf32>
    %143 = tpu.matmul %142, %13, %cst_64 {dimension_numbers = #tpu.dot_dimension_numbers<[1], [0], [0], [1], [0, 0, 1, 1], [], []>} : vector<8x75xf32>, vector<75x25xf32>, vector<8x25xf32> -> vector<8x25xf32>
    %144 = vector.broadcast %15 : vector<8x1xf32> to vector<8x25xf32>
    %145 = arith.mulf %143, %144 : vector<8x25xf32>
    %146 = vector.broadcast %17 : vector<8x1xf32> to vector<8x25xf32>
    %147 = arith.addf %145, %146 : vector<8x25xf32>
    %148 = arith.addf %147, %138 : vector<8x25xf32>
    %cst_65 = arith.constant 0.000000e+00 : f32
    %149 = vector.broadcast %cst_65 : f32 to vector<8x25xf32>
    %150 = arith.maximumf %148, %149 : vector<8x25xf32>
    %c0_66 = arith.constant 0 : index
    %c0_67 = arith.constant 0 : index
    %c7 = arith.constant 7 : index
    %c0_68 = arith.constant 0 : index
    %151 = vector.load %arg8[%c0_66, %c0_67, %c7, %c0_68] : memref<1x8x8x25xf32, #tpu.memory_space<vmem>>, vector<1x8x1x25xf32>
    %152 = vector.shape_cast %151 : vector<1x8x1x25xf32> to vector<8x25xf32>
    %153 = vector.shape_cast %150 : vector<8x25xf32> to vector<1x8x1x25xf32>
    tpu.vector_store %arg8[%c0_66, %c0_67, %c7, %c0_68], %153 {strides = array<i32>} : memref<1x8x8x25xf32, #tpu.memory_space<vmem>>, vector<1x8x1x25xf32>,
    return
  }
  func.func @transform_0(%arg0: i32, %arg1: i32) -> (i32, i32, i32) {
    %c0_i32 = arith.constant 0 : i32
    %c0_i32_0 = arith.constant 0 : i32
    %c0_i32_1 = arith.constant 0 : i32
    return %arg0, %c0_i32, %c0_i32_0 : i32, i32, i32
  }
  func.func @transform_1(%arg0: i32, %arg1: i32) -> (i32, i32, i32) {
    %c0_i32 = arith.constant 0 : i32
    %c0_i32_0 = arith.constant 0 : i32
    %c0_i32_1 = arith.constant 0 : i32
    %c0_i32_2 = arith.constant 0 : i32
    return %c0_i32, %c0_i32_0, %c0_i32_1 : i32, i32, i32
  }
  func.func @transform_2(%arg0: i32, %arg1: i32) -> (i32, i32, i32) {
    %c0_i32 = arith.constant 0 : i32
    %c0_i32_0 = arith.constant 0 : i32
    %c0_i32_1 = arith.constant 0 : i32
    %c0_i32_2 = arith.constant 0 : i32
    return %c0_i32, %c0_i32_0, %c0_i32_1 : i32, i32, i32
  }
  func.func @transform_3(%arg0: i32, %arg1: i32) -> (i32, i32, i32, i32) {
    %c0_i32 = arith.constant 0 : i32
    %c0_i32_0 = arith.constant 0 : i32
    %c0_i32_1 = arith.constant 0 : i32
    return %arg0, %arg1, %c0_i32, %c0_i32_0 : i32, i32, i32, i32
  }
  func.func @transform_4(%arg0: i32, %arg1: i32) -> (i32, i32, i32, i32) {
    %c0_i32 = arith.constant 0 : i32
    %c0_i32_0 = arith.constant 0 : i32
    %c0_i32_1 = arith.constant 0 : i32
    return %arg0, %arg1, %c0_i32, %c0_i32_0 : i32, i32, i32, i32
  }
  func.func @transform_5(%arg0: i32, %arg1: i32) -> (i32, i32, i32) {
    %c0_i32 = arith.constant 0 : i32
    %c0_i32_0 = arith.constant 0 : i32
    %c0_i32_1 = arith.constant 0 : i32
    return %arg1, %c0_i32, %c0_i32_0 : i32, i32, i32
  }
  func.func @transform_6(%arg0: i32, %arg1: i32) -> (i32, i32, i32, i32) {
    %c0_i32 = arith.constant 0 : i32
    %c0_i32_0 = arith.constant 0 : i32
    %c0_i32_1 = arith.constant 0 : i32
    return %arg0, %arg1, %c0_i32, %c0_i32_0 : i32, i32, i32, i32
  }
}

</mosaic_0001>

<llo_original>
// kernel: spatial_mixformer_forward.1
$region0: #{spatial_mixformer_forward.1}
  #allocation0 [shape = 'u32[]', space=smem, size = 0x4, offset = 0x4, fixed_abs, tag = 'smem constant byte address 0x4 - core index']
  #allocation1 [shape = 'u32[144,128]{1,0:T(1,128)}', space=vmem, size = 0x12000, scoped, tag = 'internal scratch']
  #allocation2 [shape = 'f32[32,200]{1,0:T(8,128)}', space=vmem, size = 0x8000, scoped, tag = 'scratch operand']
  %s0 = inlined_call_operand.vmem [shape: f32[2,4,200], index: 0, kind: input, shape index: {}]
  %s1 = inlined_call_operand.vmem [shape: f32[4,32,4], index: 1, kind: input, shape index: {}]
  %s2 = inlined_call_operand.vmem [shape: f32[4,32,1], index: 2, kind: input, shape index: {}]
  %s3 = inlined_call_operand.vmem [shape: f32[2,4,75,25], index: 3, kind: input, shape index: {}]
  %s4 = inlined_call_operand.vmem [shape: f32[2,4,8,1], index: 4, kind: input, shape index: {}]
  %s5 = inlined_call_operand.vmem [shape: f32[4,8,1], index: 5, kind: input, shape index: {}]
  %s6 = inlined_call_operand.vmem [shape: f32[2,32,8,25], index: 6, kind: output, shape index: {}]
  %s7 = sld [smem:[#allocation0]]
  $region57: #{spatial_mixformer_forward.1} parent=0
    _
  %s9 = ssub.s32 1, %s7
  %s10 = scalar_select 0, %s9, %s7
  loop: start=0, step=1, limit=10
  $region2: #{spatial_mixformer_forward.1} parent=0 // loop_pre_header
    _
  $region3: #{spatial_mixformer_forward.1} parent=0 // loop_header
    %s12 = sphi 0, %s16
    %p13 = scmp.ge.s32.totalorder %s12, 10
    %s19 = sphi 0, %s31
    %s20 = sphi 0, %s27
    %s21 = sphi 0, %s19
    %s22 = sphi 0, %s20
    %s23 = sphi 0, %s21
    %s24 = sphi 0, %s22
    %s34 = sphi 0, %s36
    %s37 = sphi 0, %s34
    %s38 = sphi 0, %s37
    %s54 = sphi 0, %s38
    %s58 = sphi 0, %s58
    %s60 = sphi 0, %s58
    %s61 = sphi 0, %s60
    %s75 = sphi 0, %s61
    %s79 = sphi 0, %s79
    %s81 = sphi 0, %s79
    %s82 = sphi 0, %s81
    %s96 = sphi 0, %s82
    %s104 = sphi 0, %s106
    %s107 = sphi 0, %s104
    %s108 = sphi 0, %s107
    %s124 = sphi 0, %s108
    %s132 = sphi 0, %s134
    %s135 = sphi 0, %s132
    %s136 = sphi 0, %s135
    %s152 = sphi 0, %s136
    %s158 = sphi 0, %s160
    %s161 = sphi 0, %s158
    %s162 = sphi 0, %s161
    %s178 = sphi 0, %s162
    %s186 = sphi 0, %s188
    %s189 = sphi 0, %s186
    %s190 = sphi 0, %s189
    %s206 = sphi 0, %s190
  $region4: #{spatial_mixformer_forward.1} parent=0 // loop_header_branch
    %15 = sbr.rel (%p13) target = $region8
  $region5: #{spatial_mixformer_forward.1} parent=0 // loop_body
    %s17 = ssub.s32 %s12, 1
    %s18 = ssub.s32 %s12, 2
    %s25 = sadd.s32 1, %s20
    %p26 = scmp.ge.s32.totalorder %s25, 4
    %s27 = scalar_select %p26, 0, %s25
    %s28 = sadd.s32 1, %s19
    %s29 = scalar_select %p26, %s28, %s19
    %p30 = scmp.ge.s32.totalorder %s29, 2
    %s31 = scalar_select %p30, 0, %s29
    %s32 = ssub.s32 %s19, %s31
    %p33 = scmp.eq.s32.totalorder %s32, 0
    %s35 = sadd.s32 %s34, 1
    %s36 = scalar_select %p33, %s34, %s35
    %p39 = pneg %p33
    %p40 = scmp.eq.s32.totalorder %s12, 7
    %p41 = por %p39, %p40
    %p42 = scmp.ne.s32.totalorder %s34, %s37
    %p43 = scmp.eq.s32.totalorder %s12, 0
    %p44 = por %p42, %p43
    %p45 = scmp.ne.s32.totalorder %s34, %s37
    %p46 = scmp.eq.s32.totalorder %s17, 7
    %p47 = por %p45, %p46
    %p48 = scmp.ne.s32.totalorder %s37, %s38
    %p49 = scmp.eq.s32.totalorder %s17, 0
    %p50 = por %p48, %p49
    %p51 = scmp.ne.s32.totalorder %s37, %s38
    %p52 = scmp.eq.s32.totalorder %s18, 7
    %p53 = por %p51, %p52
    %p55 = scmp.ne.s32.totalorder %s38, %s54
    %p56 = scmp.eq.s32.totalorder %s18, 0
    %p57 = por %p55, %p56
    %s59 = sadd.s32 %s58, 1
    %p62 = scmp.eq.s32.totalorder %s12, 7
    %p63 = scmp.ne.s32.totalorder %s58, %s60
    %p64 = scmp.eq.s32.totalorder %s12, 0
    %p65 = por %p63, %p64
    %p66 = scmp.ne.s32.totalorder %s58, %s60
    %p67 = scmp.eq.s32.totalorder %s17, 7
    %p68 = por %p66, %p67
    %p69 = scmp.ne.s32.totalorder %s60, %s61
    %p70 = scmp.eq.s32.totalorder %s17, 0
    %p71 = por %p69, %p70
    %p72 = scmp.ne.s32.totalorder %s60, %s61
    %p73 = scmp.eq.s32.totalorder %s18, 7
    %p74 = por %p72, %p73
    %p76 = scmp.ne.s32.totalorder %s61, %s75
    %p77 = scmp.eq.s32.totalorder %s18, 0
    %p78 = por %p76, %p77
    %s80 = sadd.s32 %s79, 1
    %p83 = scmp.eq.s32.totalorder %s12, 7
    %p84 = scmp.ne.s32.totalorder %s79, %s81
    %p85 = scmp.eq.s32.totalorder %s12, 0
    %p86 = por %p84, %p85
    %p87 = scmp.ne.s32.totalorder %s79, %s81
    %p88 = scmp.eq.s32.totalorder %s17, 7
    %p89 = por %p87, %p88
    %p90 = scmp.ne.s32.totalorder %s81, %s82
    %p91 = scmp.eq.s32.totalorder %s17, 0
    %p92 = por %p90, %p91
    %p93 = scmp.ne.s32.totalorder %s81, %s82
    %p94 = scmp.eq.s32.totalorder %s18, 7
    %p95 = por %p93, %p94
    %p97 = scmp.ne.s32.totalorder %s82, %s96
    %p98 = scmp.eq.s32.totalorder %s18, 0
    %p99 = por %p97, %p98
    %s100 = ssub.s32 %s19, %s31
    %s101 = ssub.s32 %s20, %s27
    %s102 = sor.u32 %s100, %s101
    %p103 = scmp.eq.s32.totalorder %s102, 0
    %s105 = sadd.s32 %s104, 1
    %s106 = scalar_select %p103, %s104, %s105
    %p109 = pneg %p103
    %p110 = scmp.eq.s32.totalorder %s12, 7
    %p111 = por %p109, %p110
    %p112 = scmp.ne.s32.totalorder %s104, %s107
    %p113 = scmp.eq.s32.totalorder %s12, 0
    %p114 = por %p112, %p113
    %p115 = scmp.ne.s32.totalorder %s104, %s107
    %p116 = scmp.eq.s32.totalorder %s17, 7
    %p117 = por %p115, %p116
    %p118 = scmp.ne.s32.totalorder %s107, %s108
    %p119 = scmp.eq.s32.totalorder %s17, 0
    %p120 = por %p118, %p119
    %p121 = scmp.ne.s32.totalorder %s107, %s108
    %p122 = scmp.eq.s32.totalorder %s18, 7
    %p123 = por %p121, %p122
    %p125 = scmp.ne.s32.totalorder %s108, %s124
    %p126 = scmp.eq.s32.totalorder %s18, 0
    %p127 = por %p125, %p126
    %s128 = ssub.s32 %s19, %s31
    %s129 = ssub.s32 %s20, %s27
    %s130 = sor.u32 %s128, %s129
    %p131 = scmp.eq.s32.totalorder %s130, 0
    %s133 = sadd.s32 %s132, 1
    %s134 = scalar_select %p131, %s132, %s133
    %p137 = pneg %p131
    %p138 = scmp.eq.s32.totalorder %s12, 7
    %p139 = por %p137, %p138
    %p140 = scmp.ne.s32.totalorder %s132, %s135
    %p141 = scmp.eq.s32.totalorder %s12, 0
    %p142 = por %p140, %p141
    %p143 = scmp.ne.s32.totalorder %s132, %s135
    %p144 = scmp.eq.s32.totalorder %s17, 7
    %p145 = por %p143, %p144
    %p146 = scmp.ne.s32.totalorder %s135, %s136
    %p147 = scmp.eq.s32.totalorder %s17, 0
    %p148 = por %p146, %p147
    %p149 = scmp.ne.s32.totalorder %s135, %s136
    %p150 = scmp.eq.s32.totalorder %s18, 7
    %p151 = por %p149, %p150
    %p153 = scmp.ne.s32.totalorder %s136, %s152
    %p154 = scmp.eq.s32.totalorder %s18, 0
    %p155 = por %p153, %p154
    %s156 = ssub.s32 %s20, %s27
    %p157 = scmp.eq.s32.totalorder %s156, 0
    %s159 = sadd.s32 %s158, 1
    %s160 = scalar_select %p157, %s158, %s159
    %p163 = pneg %p157
    %p164 = scmp.eq.s32.totalorder %s12, 7
    %p165 = por %p163, %p164
    %p166 = scmp.ne.s32.totalorder %s158, %s161
    %p167 = scmp.eq.s32.totalorder %s12, 0
    %p168 = por %p166, %p167
    %p169 = scmp.ne.s32.totalorder %s158, %s161
    %p170 = scmp.eq.s32.totalorder %s17, 7
    %p171 = por %p169, %p170
    %p172 = scmp.ne.s32.totalorder %s161, %s162
    %p173 = scmp.eq.s32.totalorder %s17, 0
    %p174 = por %p172, %p173
    %p175 = scmp.ne.s32.totalorder %s161, %s162
    %p176 = scmp.eq.s32.totalorder %s18, 7
    %p177 = por %p175, %p176
    %p179 = scmp.ne.s32.totalorder %s162, %s178
    %p180 = scmp.eq.s32.totalorder %s18, 0
    %p181 = por %p179, %p180
    %s182 = ssub.s32 %s19, %s31
    %s183 = ssub.s32 %s20, %s27
    %s184 = sor.u32 %s182, %s183
    %p185 = scmp.eq.s32.totalorder %s184, 0
    %s187 = sadd.s32 %s186, 1
    %s188 = scalar_select %p185, %s186, %s187
    %p191 = pneg %p185
    %p192 = scmp.eq.s32.totalorder %s12, 7
    %p193 = por %p191, %p192
    %p194 = scmp.ne.s32.totalorder %s186, %s189
    %p195 = scmp.eq.s32.totalorder %s12, 0
    %p196 = por %p194, %p195
    %p197 = scmp.ne.s32.totalorder %s186, %s189
    %p198 = scmp.eq.s32.totalorder %s17, 7
    %p199 = por %p197, %p198
    %p200 = scmp.ne.s32.totalorder %s189, %s190
    %p201 = scmp.eq.s32.totalorder %s17, 0
    %p202 = por %p200, %p201
    %p203 = scmp.ne.s32.totalorder %s189, %s190
    %p204 = scmp.eq.s32.totalorder %s18, 7
    %p205 = por %p203, %p204
    %p207 = scmp.ne.s32.totalorder %s190, %s206
    %p208 = scmp.eq.s32.totalorder %s18, 0
    %p209 = por %p207, %p208
    %p210 = scmp.le.s32.totalorder 1, %s12
    %p211 = scmp.lt.s32.totalorder %s12, 9
    %p212 = pnand %p210, %p211
    %p213 = pneg %p212
    // Predicated region
    $region9: #{spatial_mixformer_forward.1} parent=5 // pred_check
      _
    $region10: #{spatial_mixformer_forward.1} parent=5 // pred_check_branch
      %215 = sbr.rel (%p212) target = $region12
    $region11: #{spatial_mixformer_forward.1} parent=5 // pred_region
      %s216 = ssub.s32 %s12, 1
      // Predicated region
      $region13: #{spatial_mixformer_forward.1} parent=11 // pred_check
        %p217 = pneg %p71
      $region14: #{spatial_mixformer_forward.1} parent=11 // pred_check_branch
        %219 = sbr.rel (%p217) target = $region16
      $region15: #{spatial_mixformer_forward.1} parent=11 // pred_region
        _
      $region16: #{spatial_mixformer_forward.1} parent=11 // pred_fallthru
        _
      // Predicated region
      $region17: #{spatial_mixformer_forward.1} parent=11 // pred_check
        %p220 = pneg %p92
      $region18: #{spatial_mixformer_forward.1} parent=11 // pred_check_branch
        %222 = sbr.rel (%p220) target = $region20
      $region19: #{spatial_mixformer_forward.1} parent=11 // pred_region
        _
      $region20: #{spatial_mixformer_forward.1} parent=11 // pred_fallthru
        _
    $region12: #{spatial_mixformer_forward.1} parent=5 // pred_fallthru
      _
    %p223 = scmp.lt.s32.totalorder %s12, 8
    // Predicated region
    $region21: #{spatial_mixformer_forward.1} parent=5 // pred_check
      %p224 = pneg %p223
    $region22: #{spatial_mixformer_forward.1} parent=5 // pred_check_branch
      %226 = sbr.rel (%p224) target = $region24
    $region23: #{spatial_mixformer_forward.1} parent=5 // pred_region
      // Predicated region
      $region25: #{spatial_mixformer_forward.1} parent=23 // pred_check
        %p227 = pneg %p44
      $region26: #{spatial_mixformer_forward.1} parent=23 // pred_check_branch
        %229 = sbr.rel (%p227) target = $region28
      $region27: #{spatial_mixformer_forward.1} parent=23 // pred_region
        %p230 = scmp.lt.s32.totalorder %s19, 1
        %s231 = scalar_select %p230, %s19, 1
        %s232 = smul.addr %s231, 2
        %s233 = smul.addr %s232, 4
        %s234 = scalar_lea.vmem %s0, %s233
      $region28: #{spatial_mixformer_forward.1} parent=23 // pred_fallthru
        _
      // Predicated region
      $region29: #{spatial_mixformer_forward.1} parent=23 // pred_check
        %p235 = pneg %p114
      $region30: #{spatial_mixformer_forward.1} parent=23 // pred_check_branch
        %237 = sbr.rel (%p235) target = $region32
      $region31: #{spatial_mixformer_forward.1} parent=23 // pred_region
        %p238 = scmp.lt.s32.totalorder %s19, 1
        %s239 = scalar_select %p238, %s19, 1
        %p240 = scmp.lt.s32.totalorder %s20, 3
        %s241 = scalar_select %p240, %s20, 3
        %s242 = smul.addr %s241, 10
        %s243 = smul.addr %s239, 40
        %s244 = sadd.s32 %s242, %s243
        %s245 = smul.addr %s244, 8
        %s246 = scalar_lea.vmem %s3, %s245
      $region32: #{spatial_mixformer_forward.1} parent=23 // pred_fallthru
        _
      // Predicated region
      $region33: #{spatial_mixformer_forward.1} parent=23 // pred_check
        %p247 = pneg %p142
      $region34: #{spatial_mixformer_forward.1} parent=23 // pred_check_branch
        %249 = sbr.rel (%p247) target = $region36
      $region35: #{spatial_mixformer_forward.1} parent=23 // pred_region
        %p250 = scmp.lt.s32.totalorder %s19, 1
        %s251 = scalar_select %p250, %s19, 1
        %p252 = scmp.lt.s32.totalorder %s20, 3
        %s253 = scalar_select %p252, %s20, 3
        %s254 = smul.addr %s251, 4
        %s255 = sadd.s32 %s253, %s254
        %s256 = smul.addr %s255, 8
        %s257 = scalar_lea.vmem %s4, %s256
      $region36: #{spatial_mixformer_forward.1} parent=23 // pred_fallthru
        _
      // Predicated region
      $region37: #{spatial_mixformer_forward.1} parent=23 // pred_check
        %p258 = pneg %p168
      $region38: #{spatial_mixformer_forward.1} parent=23 // pred_check_branch
        %260 = sbr.rel (%p258) target = $region40
      $region39: #{spatial_mixformer_forward.1} parent=23 // pred_region
        %p261 = scmp.lt.s32.totalorder %s20, 3
        %s262 = scalar_select %p261, %s20, 3
        %s263 = smul.addr %s262, 8
        %s264 = scalar_lea.vmem %s5, %s263
      $region40: #{spatial_mixformer_forward.1} parent=23 // pred_fallthru
        _
    $region24: #{spatial_mixformer_forward.1} parent=5 // pred_fallthru
      _
    %p265 = scmp.le.s32.totalorder 1, %s12
    %p266 = scmp.lt.s32.totalorder %s12, 9
    %p267 = pnand %p265, %p266
    %p268 = pneg %p267
    // Predicated region
    $region41: #{spatial_mixformer_forward.1} parent=5 // pred_check
      _
    $region42: #{spatial_mixformer_forward.1} parent=5 // pred_check_branch
      %270 = sbr.rel (%p267) target = $region44
    $region43: #{spatial_mixformer_forward.1} parent=5 // pred_region
      %s271 = ssub.s32 %s12, 1
      %p272 = scmp.lt.s32.totalorder %s21, 1
      %s273 = scalar_select %p272, %s21, 1
      %s274 = smul.addr %s273, 2
      %s275 = smul.addr %s274, 4
      %s276 = scalar_lea.vmem %s0, %s275
      %p277 = pneg %p50
      %p278 = pneg %p47
      %p279 = pneg %p71
      %p280 = pneg %p68
      %p281 = pneg %p92
      %p282 = pneg %p89
      %p283 = scmp.lt.s32.totalorder %s21, 1
      %s284 = scalar_select %p283, %s21, 1
      %p285 = scmp.lt.s32.totalorder %s22, 3
      %s286 = scalar_select %p285, %s22, 3
      %s287 = smul.addr %s286, 10
      %s288 = smul.addr %s284, 40
      %s289 = sadd.s32 %s287, %s288
      %s290 = smul.addr %s289, 8
      %s291 = scalar_lea.vmem %s3, %s290
      %p292 = pneg %p120
      %p293 = pneg %p117
      %p294 = scmp.lt.s32.totalorder %s21, 1
      %s295 = scalar_select %p294, %s21, 1
      %p296 = scmp.lt.s32.totalorder %s22, 3
      %s297 = scalar_select %p296, %s22, 3
      %s298 = smul.addr %s295, 4
      %s299 = sadd.s32 %s297, %s298
      %s300 = smul.addr %s299, 8
      %s301 = scalar_lea.vmem %s4, %s300
      %p302 = pneg %p148
      %p303 = pneg %p145
      %p304 = scmp.lt.s32.totalorder %s22, 3
      %s305 = scalar_select %p304, %s22, 3
      %s306 = smul.addr %s305, 8
      %s307 = scalar_lea.vmem %s5, %s306
      %p308 = pneg %p174
      %p309 = pneg %p171
      %p310 = pneg %p202
      %p311 = pneg %p199
      %s312 = smul.u32 8, %s22
      %p313 = scmp.lt.s32.totalorder %s21, 1
      %s314 = scalar_select %p313, %s21, 1
      %p315 = scmp.lt.s32.totalorder %s312, 31
      %s316 = scalar_select %p315, %s312, 31
      %s317 = smul.addr %s314, 32
      %s318 = sadd.s32 %s316, %s317
      %s319 = smul.addr %s318, 8
      %s320 = scalar_lea.vmem %s6, %s319
      %p321 = scmp.lt.s32.totalorder %s21, 1
      %s322 = scalar_select %p321, %s21, 1
      %s323 = smul.addr %s322, 2
      %s324 = smul.addr %s323, 4
      %s325 = scalar_lea.vmem %s0, %s324
      %p326 = scmp.lt.s32.totalorder %s21, 1
      %s327 = scalar_select %p326, %s21, 1
      %p328 = scmp.lt.s32.totalorder %s22, 3
      %s329 = scalar_select %p328, %s22, 3
      %s330 = smul.addr %s329, 10
      %s331 = smul.addr %s327, 40
      %s332 = sadd.s32 %s330, %s331
      %s333 = smul.addr %s332, 8
      %s334 = scalar_lea.vmem %s3, %s333
      %p335 = scmp.lt.s32.totalorder %s21, 1
      %s336 = scalar_select %p335, %s21, 1
      %p337 = scmp.lt.s32.totalorder %s22, 3
      %s338 = scalar_select %p337, %s22, 3
      %s339 = smul.addr %s336, 4
      %s340 = sadd.s32 %s338, %s339
      %s341 = smul.addr %s340, 8
      %s342 = scalar_lea.vmem %s4, %s341
      %p343 = scmp.lt.s32.totalorder %s22, 3
      %s344 = scalar_select %p343, %s22, 3
      %s345 = smul.addr %s344, 8
      %s346 = scalar_lea.vmem %s5, %s345
      %s347 = smul.u32 8, %s22
      %p348 = scmp.lt.s32.totalorder %s21, 1
      %s349 = scalar_select %p348, %s21, 1
      %p350 = scmp.lt.s32.totalorder %s347, 31
      %s351 = scalar_select %p350, %s347, 31
      %s352 = smul.addr %s349, 32
      %s353 = sadd.s32 %s351, %s352
      %s354 = smul.addr %s353, 8
      %s355 = scalar_lea.vmem %s6, %s354
      %s356 = smul.u32 8, %s22
      %s357 = smul.u32 %s22, 32
      %s358 = scalar_lea.vmem %s1, %s357
      %v359 = vld [vmem:[%s358] sm:$0xff]
      %v360 = vld [vmem:[%s358 + $0x8] sm:$0xff]
      %v361 = vld [vmem:[%s358 + $0x10] sm:$0xff]
      %v362 = vld [vmem:[%s358 + $0x18] sm:$0xff]
      %s363 = scalar_lea.vmem %s2, %s357
      %v364 = vld [vmem:[%s363] sm:$0xff]
      %v365 = vld [vmem:[%s363 + $0x8] sm:$0xff]
      %v366 = vld [vmem:[%s363 + $0x10] sm:$0xff]
      %v367 = vld [vmem:[%s363 + $0x18] sm:$0xff]
      %v368 = vld [vmem:[%s325] sm:$0xff]
      %370 = vset.pattern.permute.xlu0 0
      %371 = vperm.xlu0 %370, %v364
      %v372 = vpop.permute.xlu0 %371
      %375 = vset.pattern.permute.xlu0 0
      %376 = vperm.xlu0 %375, %v365
      %v377 = vpop.permute.xlu0 %376
      %380 = vset.pattern.permute.xlu0 0
      %381 = vperm.xlu0 %380, %v366
      %v382 = vpop.permute.xlu0 %381
      %385 = vset.pattern.permute.xlu0 0
      %386 = vperm.xlu0 %385, %v367
      %v387 = vpop.permute.xlu0 %386
      %v390 = vcombine.high %v368, %v368
      %vm391 = vcmask 31744
      %v393 = vsel %vm391, %v359, 0
      %v396 = vsel %vm391, %v360, 0
      %v399 = vsel %vm391, %v361, 0
      %v402 = vsel %vm391, %v362, 0
      %vm404 = vcmask 1043456
      %v405 = vsel %vm404, %v368, 0
      %v407 = vsel %vm404, %v390, 0
      %409 = vmatprep.subr.mxu0 0.0
      %410 = vmatpush1.msra.mxu0 0.0
      %411 = vmatprep.subr.mxu0 0.0
      %412 = vmatpush1.msra.mxu0 0.0
      %413 = vmatprep.subr.mxu0 0.0
      %414 = vmatpush1.msra.mxu0 0.0
      %415 = vmatprep.subr.mxu0 0.0
      %416 = vmatpush1.msra.mxu0 0.0
      %417 = vmatprep.subr.mxu0 0.0
      %418 = vmatpush1.msra.mxu0 0.0
      %419 = vmatprep.subr.mxu0 0.0
      %420 = vmatpush1.msra.mxu0 0.0
      %421 = vmatprep.subr.mxu0 0.0
      %422 = vmatpush1.msra.mxu0 0.0
      %423 = vmatprep.subr.mxu0 0.0
      %424 = vmatpush1.msra.mxu0 0.0
      %425 = vmatprep.subr.mxu0 0.0
      %426 = vmatpush1.msra.mxu0 0.0
      %427 = vmatprep.subr.mxu0 0.0
      %428 = vmatpush1.msra.mxu0 0.0
      %429 = vmatprep.subr.mxu0 0.0
      %430 = vmatpush1.msra.mxu0 0.0
      %431 = vmatprep.subr.mxu0 0.0
      %432 = vmatpush1.msra.mxu0 0.0
      %433 = vmatprep.subr.mxu0 0.0
      %434 = vmatpush1.msra.mxu0 0.0
      %435 = vmatprep.subr.mxu0 0.0
      %436 = vmatpush1.msra.mxu0 0.0
      %437 = vmatprep.subr.mxu0 0.0
      %438 = vmatpush1.msra.mxu0 0.0
      %439 = vmatprep.subr.mxu0 %v407
      %440 = vmatpush1.msra.mxu0 %v405
      %441 = vmatprep.subr.mxu0 0.0
      %442 = vmatpush2.msra.mxu0 0.0
      %443 = vmatprep.subr.mxu0 0.0
      %444 = vmatpush2.msra.mxu0 0.0
      %445 = vmatprep.subr.mxu0 0.0
      %446 = vmatpush2.msra.mxu0 0.0
      %447 = vmatprep.subr.mxu0 0.0
      %448 = vmatpush2.msra.mxu0 0.0
      %449 = vmatprep.subr.mxu0 0.0
      %450 = vmatpush2.msra.mxu0 0.0
      %451 = vmatprep.subr.mxu0 0.0
      %452 = vmatpush2.msra.mxu0 0.0
      %453 = vmatprep.subr.mxu0 0.0
      %454 = vmatpush2.msra.mxu0 0.0
      %455 = vmatprep.subr.mxu0 0.0
      %456 = vmatpush2.msra.mxu0 0.0
      %457 = vmatprep.subr.mxu0 0.0
      %458 = vmatpush2.msra.mxu0 0.0
      %459 = vmatprep.subr.mxu0 0.0
      %460 = vmatpush2.msra.mxu0 0.0
      %461 = vmatprep.subr.mxu0 0.0
      %462 = vmatpush2.msra.mxu0 0.0
      %463 = vmatprep.subr.mxu0 0.0
      %464 = vmatpush2.msra.mxu0 0.0
      %465 = vmatprep.subr.mxu0 0.0
      %466 = vmatpush2.msra.mxu0 0.0
      %467 = vmatprep.subr.mxu0 0.0
      %468 = vmatpush2.msra.mxu0 0.0
      %469 = vmatprep.subr.mxu0 0.0
      %470 = vmatpush2.msra.mxu0 0.0
      %471 = vmatprep.subr.mxu0 0.0
      %472 = vmatpush2.msra.mxu0 0.0
      %473 = vmatprep.mubr.f32.mxu0 0.0
      %474 = vmatmul.mubr.f32.gmra.mxu0 %v393
      %v475 = vpop.f32.mrf.mxu0
      %v476 = vadd.f32 %v372, %v475
      %v477 = vpop.f32.mrf.mxu0
      %v478 = vadd.f32 %v372, %v477
      %479 = vmatprep.mubr.f32.mxu0 0.0
      %480 = vmatmul.mubr.f32.gmra.mxu0 %v396
      %v481 = vpop.f32.mrf.mxu0
      %v482 = vadd.f32 %v377, %v481
      %v483 = vpop.f32.mrf.mxu0
      %v484 = vadd.f32 %v377, %v483
      %485 = vmatprep.mubr.f32.mxu0 0.0
      %486 = vmatmul.mubr.f32.gmra.mxu0 %v399
      %v487 = vpop.f32.mrf.mxu0
      %v488 = vadd.f32 %v382, %v487
      %v489 = vpop.f32.mrf.mxu0
      %v490 = vadd.f32 %v382, %v489
      %491 = vmatprep.mubr.f32.mxu0 0.0
      %492 = vmatmul.mubr.f32.gmra.mxu0 %v402
      %v493 = vpop.f32.mrf.mxu0
      %v494 = vadd.f32 %v387, %v493
      %v495 = vpop.f32.mrf.mxu0
      %v496 = vadd.f32 %v387, %v495
      %497 = vdwg.mxu0
      %498 = vst [vmem:[#allocation2] sm:$0xff] %v476
      %vm499 = vcmask 588800
      %500 = vst.msk [vmem:[#allocation2 + $0x8] sm:$0xff] %vm499, %v478
      %501 = vst [vmem:[#allocation2 + $0x10] sm:$0xff] %v482
      %502 = vst.msk [vmem:[#allocation2 + $0x18] sm:$0xff] %vm499, %v484
      %503 = vst [vmem:[#allocation2 + $0x20] sm:$0xff] %v488
      %504 = vst.msk [vmem:[#allocation2 + $0x28] sm:$0xff] %vm499, %v490
      %505 = vst [vmem:[#allocation2 + $0x30] sm:$0xff] %v494
      %506 = vst.msk [vmem:[#allocation2 + $0x38] sm:$0xff] %vm499, %v496
      %v507 = vld [vmem:[%s334] sm:$0xff]
      %v508 = vld [vmem:[%s334 + $0x8] sm:$0xff]
      %v509 = vld [vmem:[%s334 + $0x10] sm:$0xff]
      %v510 = vld [vmem:[%s334 + $0x18] sm:$0xff]
      %v511 = vld [vmem:[%s334 + $0x20] sm:$0xff]
      %v512 = vld [vmem:[%s334 + $0x28] sm:$0xff]
      %v513 = vld [vmem:[%s334 + $0x30] sm:$0xff]
      %v514 = vld [vmem:[%s334 + $0x38] sm:$0xff]
      %v515 = vld [vmem:[%s334 + $0x40] sm:$0xff]
      %v516 = vld [vmem:[%s334 + $0x48] sm:$0x7]
      %v517 = vld [vmem:[%s342] sm:$0xff]
      %v518 = vld [vmem:[%s346] sm:$0xff]
      %v519 = vld [vmem:[#allocation2] sm:$0xff]
      %v520 = vld [vmem:[#allocation2 + $0x10] sm:$0xff]
      %v521 = vld [vmem:[#allocation2 + $0x20] sm:$0xff]
      %v522 = vld [vmem:[#allocation2 + $0x30] sm:$0xff]
      %524 = vrot.lane.b32.xlu0 %v521, 25
      %v525 = vpop.permute.xlu0 %524
      %528 = vrot.lane.b32.xlu0 %v522, 50
      %v529 = vpop.permute.xlu0 %528
      %vm531 = vcmask 203776
      %v532 = vsel %vm531, %v520, %v525
      %vm533 = vcmask 408576
      %v534 = vsel %vm533, %v532, %v529
      %vm535 = vcmask 613376
      %v537 = vsel %vm535, %v534, 0
      %vm539 = vcmask 1042432
      %v541 = vsel %vm539, %v516, 0
      %543 = vmatprep.subr.mxu0 0.0
      %544 = vmatpush1.msra.mxu0 0.0
      %545 = vmatprep.subr.mxu0 0.0
      %546 = vmatpush1.msra.mxu0 0.0
      %547 = vmatprep.subr.mxu0 0.0
      %548 = vmatpush1.msra.mxu0 0.0
      %549 = vmatprep.subr.mxu0 0.0
      %550 = vmatpush1.msra.mxu0 0.0
      %551 = vmatprep.subr.mxu0 0.0
      %552 = vmatpush1.msra.mxu0 0.0
      %553 = vmatprep.subr.mxu0 0.0
      %554 = vmatpush1.msra.mxu0 0.0
      %555 = vmatprep.subr.mxu0 0.0
      %556 = vmatpush1.msra.mxu0 %v541
      %557 = vmatprep.subr.mxu0 0.0
      %558 = vmatpush1.msra.mxu0 %v515
      %559 = vmatprep.subr.mxu0 0.0
      %560 = vmatpush1.msra.mxu0 %v514
      %561 = vmatprep.subr.mxu0 0.0
      %562 = vmatpush1.msra.mxu0 %v513
      %563 = vmatprep.subr.mxu0 0.0
      %564 = vmatpush1.msra.mxu0 %v512
      %565 = vmatprep.subr.mxu0 0.0
      %566 = vmatpush1.msra.mxu0 %v511
      %567 = vmatprep.subr.mxu0 0.0
      %568 = vmatpush1.msra.mxu0 %v510
      %569 = vmatprep.subr.mxu0 0.0
      %570 = vmatpush1.msra.mxu0 %v509
      %571 = vmatprep.subr.mxu0 0.0
      %572 = vmatpush1.msra.mxu0 %v508
      %573 = vmatprep.subr.mxu0 0.0
      %574 = vmatpush1.msra.mxu0 %v507
      %575 = vmatprep.subr.mxu0 0.0
      %576 = vmatpush2.msra.mxu0 0.0
      %577 = vmatprep.subr.mxu0 0.0
      %578 = vmatpush2.msra.mxu0 0.0
      %579 = vmatprep.subr.mxu0 0.0
      %580 = vmatpush2.msra.mxu0 0.0
      %581 = vmatprep.subr.mxu0 0.0
      %582 = vmatpush2.msra.mxu0 0.0
      %583 = vmatprep.subr.mxu0 0.0
      %584 = vmatpush2.msra.mxu0 0.0
      %585 = vmatprep.subr.mxu0 0.0
      %586 = vmatpush2.msra.mxu0 0.0
      %587 = vmatprep.subr.mxu0 0.0
      %588 = vmatpush2.msra.mxu0 0.0
      %589 = vmatprep.subr.mxu0 0.0
      %590 = vmatpush2.msra.mxu0 0.0
      %591 = vmatprep.subr.mxu0 0.0
      %592 = vmatpush2.msra.mxu0 0.0
      %593 = vmatprep.subr.mxu0 0.0
      %594 = vmatpush2.msra.mxu0 0.0
      %595 = vmatprep.subr.mxu0 0.0
      %596 = vmatpush2.msra.mxu0 0.0
      %597 = vmatprep.subr.mxu0 0.0
      %598 = vmatpush2.msra.mxu0 0.0
      %599 = vmatprep.subr.mxu0 0.0
      %600 = vmatpush2.msra.mxu0 0.0
      %601 = vmatprep.subr.mxu0 0.0
      %602 = vmatpush2.msra.mxu0 0.0
      %603 = vmatprep.subr.mxu0 0.0
      %604 = vmatpush2.msra.mxu0 0.0
      %605 = vmatprep.subr.mxu0 0.0
      %606 = vmatpush2.msra.mxu0 0.0
      %607 = vmatprep.mubr.f32.mxu0 0.0
      %608 = vmatmul.mubr.f32.gmra.mxu0 %v537
      %v609 = vpop.f32.mrf.mxu0
      %v610 = vadd.f32 0.0, %v609
      %v611 = vpop.f32.mrf.mxu0
      %612 = vdwg.mxu0
      %614 = vset.pattern.permute.xlu0 0
      %615 = vperm.xlu0 %614, %v517
      %v616 = vpop.permute.xlu0 %615
      %v618 = vmul.f32 %v610, %v616
      %620 = vset.pattern.permute.xlu0 0
      %621 = vperm.xlu0 %620, %v518
      %v622 = vpop.permute.xlu0 %621
      %v624 = vadd.f32 %v618, %v622
      %v625 = vadd.f32 %v624, %v519
      %v626 = vmax.f32 %v625, 0.0
      %v628 = vcombine.high %v626, %v626
      %v630 = vunpack.c.l.s4 1966171168
      %v631 = vunpack.c.0.s8 %v630
      %v632 = vlaneseq
      %v633 = vshrl.u32 %v632, 7
      %v634 = vsub.s32 %v631, %v633
      %v635 = vrot.slane %v626, %v634
      %v637 = vunpack.c.l.s4 1966171168
      %v638 = vunpack.c.0.s8 %v637
      %v639 = vlaneseq
      %v640 = vshrl.u32 %v639, 7
      %v641 = vsub.s32 %v638, %v640
      %v642 = vrot.slane %v628, %v641
      %v643 = vcombine.high %v635, %v635
      %v644 = vcombine.high %v642, %v642
      %v646 = vunpack.c.l.s4 1966171168
      %v647 = vunpack.c.0.s8 %v646
      %v648 = vlaneseq
      %v649 = vshrl.u32 %v648, 7
      %v650 = vsub.s32 %v647, %v649
      %v651 = vrot.slane %v635, %v650
      %v653 = vunpack.c.l.s4 1966171168
      %v654 = vunpack.c.0.s8 %v653
      %v655 = vlaneseq
      %v656 = vshrl.u32 %v655, 7
      %v657 = vsub.s32 %v654, %v656
      %v658 = vrot.slane %v642, %v657
      %v660 = vunpack.c.l.s4 1966171168
      %v661 = vunpack.c.0.s8 %v660
      %v662 = vlaneseq
      %v663 = vshrl.u32 %v662, 7
      %v664 = vsub.s32 %v661, %v663
      %v665 = vrot.slane %v643, %v664
      %v667 = vunpack.c.l.s4 1966171168
      %v668 = vunpack.c.0.s8 %v667
      %v669 = vlaneseq
      %v670 = vshrl.u32 %v669, 7
      %v671 = vsub.s32 %v668, %v670
      %v672 = vrot.slane %v644, %v671
      %v673 = vcombine.high %v651, %v651
      %v674 = vcombine.high %v658, %v658
      %v675 = vcombine.high %v665, %v665
      %v676 = vcombine.high %v672, %v672
      %vm685 = vcmask 196608
      %686 = vst.msk [vmem:[%s355] sm:$0x1] %vm685, %v651
      %687 = vst.msk [vmem:[%s355 + $0x8] sm:$0x1] %vm685, %v665
      %688 = vst.msk [vmem:[%s355 + $0x10] sm:$0x1] %vm685, %v673
      %689 = vst.msk [vmem:[%s355 + $0x18] sm:$0x1] %vm685, %v675
      %690 = vst.msk [vmem:[%s355 + $0x20] sm:$0x1] %vm685, %v658
      %691 = vst.msk [vmem:[%s355 + $0x28] sm:$0x1] %vm685, %v672
      %692 = vst.msk [vmem:[%s355 + $0x30] sm:$0x1] %vm685, %v674
      %693 = vst.msk [vmem:[%s355 + $0x38] sm:$0x1] %vm685, %v676
      %v694 = vld [vmem:[#allocation2] sm:$0xff]
      %v695 = vld [vmem:[#allocation2 + $0x10] sm:$0xff]
      %v696 = vld [vmem:[#allocation2 + $0x20] sm:$0xff]
      %v697 = vld [vmem:[#allocation2 + $0x30] sm:$0xff]
      %699 = vrot.lane.b32.xlu0 %v695, 103
      %v700 = vpop.permute.xlu0 %699
      %703 = vrot.lane.b32.xlu0 %v697, 25
      %v704 = vpop.permute.xlu0 %703
      %v706 = vsel %vm531, %v700, %v696
      %v707 = vsel %vm533, %v706, %v704
      %v709 = vsel %vm535, %v707, 0
      %711 = vmatprep.subr.mxu0 0.0
      %712 = vmatpush1.msra.mxu0 0.0
      %713 = vmatprep.subr.mxu0 0.0
      %714 = vmatpush1.msra.mxu0 0.0
      %715 = vmatprep.subr.mxu0 0.0
      %716 = vmatpush1.msra.mxu0 0.0
      %717 = vmatprep.subr.mxu0 0.0
      %718 = vmatpush1.msra.mxu0 0.0
      %719 = vmatprep.subr.mxu0 0.0
      %720 = vmatpush1.msra.mxu0 0.0
      %721 = vmatprep.subr.mxu0 0.0
      %722 = vmatpush1.msra.mxu0 0.0
      %723 = vmatprep.subr.mxu0 0.0
      %724 = vmatpush1.msra.mxu0 %v541
      %725 = vmatprep.subr.mxu0 0.0
      %726 = vmatpush1.msra.mxu0 %v515
      %727 = vmatprep.subr.mxu0 0.0
      %728 = vmatpush1.msra.mxu0 %v514
      %729 = vmatprep.subr.mxu0 0.0
      %730 = vmatpush1.msra.mxu0 %v513
      %731 = vmatprep.subr.mxu0 0.0
      %732 = vmatpush1.msra.mxu0 %v512
      %733 = vmatprep.subr.mxu0 0.0
      %734 = vmatpush1.msra.mxu0 %v511
      %735 = vmatprep.subr.mxu0 0.0
      %736 = vmatpush1.msra.mxu0 %v510
      %737 = vmatprep.subr.mxu0 0.0
      %738 = vmatpush1.msra.mxu0 %v509
      %739 = vmatprep.subr.mxu0 0.0
      %740 = vmatpush1.msra.mxu0 %v508
      %741 = vmatprep.subr.mxu0 0.0
      %742 = vmatpush1.msra.mxu0 %v507
      %743 = vmatprep.subr.mxu0 0.0
      %744 = vmatpush2.msra.mxu0 0.0
      %745 = vmatprep.subr.mxu0 0.0
      %746 = vmatpush2.msra.mxu0 0.0
      %747 = vmatprep.subr.mxu0 0.0
      %748 = vmatpush2.msra.mxu0 0.0
      %749 = vmatprep.subr.mxu0 0.0
      %750 = vmatpush2.msra.mxu0 0.0
      %751 = vmatprep.subr.mxu0 0.0
      %752 = vmatpush2.msra.mxu0 0.0
      %753 = vmatprep.subr.mxu0 0.0
      %754 = vmatpush2.msra.mxu0 0.0
      %755 = vmatprep.subr.mxu0 0.0
      %756 = vmatpush2.msra.mxu0 0.0
      %757 = vmatprep.subr.mxu0 0.0
      %758 = vmatpush2.msra.mxu0 0.0
      %759 = vmatprep.subr.mxu0 0.0
      %760 = vmatpush2.msra.mxu0 0.0
      %761 = vmatprep.subr.mxu0 0.0
      %762 = vmatpush2.msra.mxu0 0.0
      %763 = vmatprep.subr.mxu0 0.0
      %764 = vmatpush2.msra.mxu0 0.0
      %765 = vmatprep.subr.mxu0 0.0
      %766 = vmatpush2.msra.mxu0 0.0
      %767 = vmatprep.subr.mxu0 0.0
      %768 = vmatpush2.msra.mxu0 0.0
      %769 = vmatprep.subr.mxu0 0.0
      %770 = vmatpush2.msra.mxu0 0.0
      %771 = vmatprep.subr.mxu0 0.0
      %772 = vmatpush2.msra.mxu0 0.0
      %773 = vmatprep.subr.mxu0 0.0
      %774 = vmatpush2.msra.mxu0 0.0
      %775 = vmatprep.mubr.f32.mxu0 0.0
      %776 = vmatmul.mubr.f32.gmra.mxu0 %v709
      %v777 = vpop.f32.mrf.mxu0
      %v778 = vadd.f32 0.0, %v777
      %v779 = vpop.f32.mrf.mxu0
      %780 = vdwg.mxu0
      %v781 = vmul.f32 %v778, %v616
      %v782 = vadd.f32 %v781, %v622
      %784 = vrot.lane.b32.xlu0 %v694, 103
      %v785 = vpop.permute.xlu0 %784
      %v787 = vadd.f32 %v782, %v785
      %v788 = vmax.f32 %v787, 0.0
      %v790 = vcombine.high %v788, %v788
      %v792 = vunpack.c.l.s4 1966171168
      %v793 = vunpack.c.0.s8 %v792
      %v794 = vlaneseq
      %v795 = vshrl.u32 %v794, 7
      %v796 = vsub.s32 %v793, %v795
      %v797 = vrot.slane %v788, %v796
      %v799 = vunpack.c.l.s4 1966171168
      %v800 = vunpack.c.0.s8 %v799
      %v801 = vlaneseq
      %v802 = vshrl.u32 %v801, 7
      %v803 = vsub.s32 %v800, %v802
      %v804 = vrot.slane %v790, %v803
      %v805 = vcombine.high %v797, %v797
      %v806 = vcombine.high %v804, %v804
      %v808 = vunpack.c.l.s4 1966171168
      %v809 = vunpack.c.0.s8 %v808
      %v810 = vlaneseq
      %v811 = vshrl.u32 %v810, 7
      %v812 = vsub.s32 %v809, %v811
      %v813 = vrot.slane %v797, %v812
      %v815 = vunpack.c.l.s4 1966171168
      %v816 = vunpack.c.0.s8 %v815
      %v817 = vlaneseq
      %v818 = vshrl.u32 %v817, 7
      %v819 = vsub.s32 %v816, %v818
      %v820 = vrot.slane %v804, %v819
      %v822 = vunpack.c.l.s4 1966171168
      %v823 = vunpack.c.0.s8 %v822
      %v824 = vlaneseq
      %v825 = vshrl.u32 %v824, 7
      %v826 = vsub.s32 %v823, %v825
      %v827 = vrot.slane %v805, %v826
      %v829 = vunpack.c.l.s4 1966171168
      %v830 = vunpack.c.0.s8 %v829
      %v831 = vlaneseq
      %v832 = vshrl.u32 %v831, 7
      %v833 = vsub.s32 %v830, %v832
      %v834 = vrot.slane %v806, %v833
      %v835 = vcombine.high %v813, %v813
      %v836 = vcombine.high %v820, %v820
      %v837 = vcombine.high %v827, %v827
      %v838 = vcombine.high %v834, %v834
      %847 = vst.msk [vmem:[%s355 + $0x1] sm:$0x1] %vm685, %v813
      %848 = vst.msk [vmem:[%s355 + $0x9] sm:$0x1] %vm685, %v827
      %849 = vst.msk [vmem:[%s355 + $0x11] sm:$0x1] %vm685, %v835
      %850 = vst.msk [vmem:[%s355 + $0x19] sm:$0x1] %vm685, %v837
      %851 = vst.msk [vmem:[%s355 + $0x21] sm:$0x1] %vm685, %v820
      %852 = vst.msk [vmem:[%s355 + $0x29] sm:$0x1] %vm685, %v834
      %853 = vst.msk [vmem:[%s355 + $0x31] sm:$0x1] %vm685, %v836
      %854 = vst.msk [vmem:[%s355 + $0x39] sm:$0x1] %vm685, %v838
      %v855 = vld [vmem:[#allocation2] sm:$0xff]
      %v856 = vld [vmem:[#allocation2 + $0x10] sm:$0xff]
      %v857 = vld [vmem:[#allocation2 + $0x20] sm:$0xff]
      %v858 = vld [vmem:[#allocation2 + $0x30] sm:$0xff]
      %860 = vrot.lane.b32.xlu0 %v856, 78
      %v861 = vpop.permute.xlu0 %860
      %864 = vrot.lane.b32.xlu0 %v857, 103
      %v865 = vpop.permute.xlu0 %864
      %v867 = vsel %vm531, %v861, %v865
      %v868 = vsel %vm533, %v867, %v858
      %v870 = vsel %vm535, %v868, 0
      %872 = vmatprep.subr.mxu0 0.0
      %873 = vmatpush1.msra.mxu0 0.0
      %874 = vmatprep.subr.mxu0 0.0
      %875 = vmatpush1.msra.mxu0 0.0
      %876 = vmatprep.subr.mxu0 0.0
      %877 = vmatpush1.msra.mxu0 0.0
      %878 = vmatprep.subr.mxu0 0.0
      %879 = vmatpush1.msra.mxu0 0.0
      %880 = vmatprep.subr.mxu0 0.0
      %881 = vmatpush1.msra.mxu0 0.0
      %882 = vmatprep.subr.mxu0 0.0
      %883 = vmatpush1.msra.mxu0 0.0
      %884 = vmatprep.subr.mxu0 0.0
      %885 = vmatpush1.msra.mxu0 %v541
      %886 = vmatprep.subr.mxu0 0.0
      %887 = vmatpush1.msra.mxu0 %v515
      %888 = vmatprep.subr.mxu0 0.0
      %889 = vmatpush1.msra.mxu0 %v514
      %890 = vmatprep.subr.mxu0 0.0
      %891 = vmatpush1.msra.mxu0 %v513
      %892 = vmatprep.subr.mxu0 0.0
      %893 = vmatpush1.msra.mxu0 %v512
      %894 = vmatprep.subr.mxu0 0.0
      %895 = vmatpush1.msra.mxu0 %v511
      %896 = vmatprep.subr.mxu0 0.0
      %897 = vmatpush1.msra.mxu0 %v510
      %898 = vmatprep.subr.mxu0 0.0
      %899 = vmatpush1.msra.mxu0 %v509
      %900 = vmatprep.subr.mxu0 0.0
      %901 = vmatpush1.msra.mxu0 %v508
      %902 = vmatprep.subr.mxu0 0.0
      %903 = vmatpush1.msra.mxu0 %v507
      %904 = vmatprep.subr.mxu0 0.0
      %905 = vmatpush2.msra.mxu0 0.0
      %906 = vmatprep.subr.mxu0 0.0
      %907 = vmatpush2.msra.mxu0 0.0
      %908 = vmatprep.subr.mxu0 0.0
      %909 = vmatpush2.msra.mxu0 0.0
      %910 = vmatprep.subr.mxu0 0.0
      %911 = vmatpush2.msra.mxu0 0.0
      %912 = vmatprep.subr.mxu0 0.0
      %913 = vmatpush2.msra.mxu0 0.0
      %914 = vmatprep.subr.mxu0 0.0
      %915 = vmatpush2.msra.mxu0 0.0
      %916 = vmatprep.subr.mxu0 0.0
      %917 = vmatpush2.msra.mxu0 0.0
      %918 = vmatprep.subr.mxu0 0.0
      %919 = vmatpush2.msra.mxu0 0.0
      %920 = vmatprep.subr.mxu0 0.0
      %921 = vmatpush2.msra.mxu0 0.0
      %922 = vmatprep.subr.mxu0 0.0
      %923 = vmatpush2.msra.mxu0 0.0
      %924 = vmatprep.subr.mxu0 0.0
      %925 = vmatpush2.msra.mxu0 0.0
      %926 = vmatprep.subr.mxu0 0.0
      %927 = vmatpush2.msra.mxu0 0.0
      %928 = vmatprep.subr.mxu0 0.0
      %929 = vmatpush2.msra.mxu0 0.0
      %930 = vmatprep.subr.mxu0 0.0
      %931 = vmatpush2.msra.mxu0 0.0
      %932 = vmatprep.subr.mxu0 0.0
      %933 = vmatpush2.msra.mxu0 0.0
      %934 = vmatprep.subr.mxu0 0.0
      %935 = vmatpush2.msra.mxu0 0.0
      %936 = vmatprep.mubr.f32.mxu0 0.0
      %937 = vmatmul.mubr.f32.gmra.mxu0 %v870
      %v938 = vpop.f32.mrf.mxu0
      %v939 = vadd.f32 0.0, %v938
      %v940 = vpop.f32.mrf.mxu0
      %941 = vdwg.mxu0
      %v942 = vmul.f32 %v939, %v616
      %v943 = vadd.f32 %v942, %v622
      %945 = vrot.lane.b32.xlu0 %v855, 78
      %v946 = vpop.permute.xlu0 %945
      %v948 = vadd.f32 %v943, %v946
      %v949 = vmax.f32 %v948, 0.0
      %v951 = vcombine.high %v949, %v949
      %v953 = vunpack.c.l.s4 1966171168
      %v954 = vunpack.c.0.s8 %v953
      %v955 = vlaneseq
      %v956 = vshrl.u32 %v955, 7
      %v957 = vsub.s32 %v954, %v956
      %v958 = vrot.slane %v949, %v957
      %v960 = vunpack.c.l.s4 1966171168
      %v961 = vunpack.c.0.s8 %v960
      %v962 = vlaneseq
      %v963 = vshrl.u32 %v962, 7
      %v964 = vsub.s32 %v961, %v963
      %v965 = vrot.slane %v951, %v964
      %v966 = vcombine.high %v958, %v958
      %v967 = vcombine.high %v965, %v965
      %v969 = vunpack.c.l.s4 1966171168
      %v970 = vunpack.c.0.s8 %v969
      %v971 = vlaneseq
      %v972 = vshrl.u32 %v971, 7
      %v973 = vsub.s32 %v970, %v972
      %v974 = vrot.slane %v958, %v973
      %v976 = vunpack.c.l.s4 1966171168
      %v977 = vunpack.c.0.s8 %v976
      %v978 = vlaneseq
      %v979 = vshrl.u32 %v978, 7
      %v980 = vsub.s32 %v977, %v979
      %v981 = vrot.slane %v965, %v980
      %v983 = vunpack.c.l.s4 1966171168
      %v984 = vunpack.c.0.s8 %v983
      %v985 = vlaneseq
      %v986 = vshrl.u32 %v985, 7
      %v987 = vsub.s32 %v984, %v986
      %v988 = vrot.slane %v966, %v987
      %v990 = vunpack.c.l.s4 1966171168
      %v991 = vunpack.c.0.s8 %v990
      %v992 = vlaneseq
      %v993 = vshrl.u32 %v992, 7
      %v994 = vsub.s32 %v991, %v993
      %v995 = vrot.slane %v967, %v994
      %v996 = vcombine.high %v974, %v974
      %v997 = vcombine.high %v981, %v981
      %v998 = vcombine.high %v988, %v988
      %v999 = vcombine.high %v995, %v995
      %1008 = vst.msk [vmem:[%s355 + $0x2] sm:$0x1] %vm685, %v974
      %1009 = vst.msk [vmem:[%s355 + $0xa] sm:$0x1] %vm685, %v988
      %1010 = vst.msk [vmem:[%s355 + $0x12] sm:$0x1] %vm685, %v996
      %1011 = vst.msk [vmem:[%s355 + $0x1a] sm:$0x1] %vm685, %v998
      %1012 = vst.msk [vmem:[%s355 + $0x22] sm:$0x1] %vm685, %v981
      %1013 = vst.msk [vmem:[%s355 + $0x2a] sm:$0x1] %vm685, %v995
      %1014 = vst.msk [vmem:[%s355 + $0x32] sm:$0x1] %vm685, %v997
      %1015 = vst.msk [vmem:[%s355 + $0x3a] sm:$0x1] %vm685, %v999
      %v1016 = vld [vmem:[#allocation2] sm:$0xff]
      %v1017 = vld [vmem:[#allocation2 + $0x10] sm:$0xff]
      %v1018 = vld [vmem:[#allocation2 + $0x20] sm:$0xff]
      %v1019 = vld [vmem:[#allocation2 + $0x30] sm:$0xff]
      %1021 = vrot.lane.b32.xlu0 %v1017, 53
      %v1022 = vpop.permute.xlu0 %1021
      %1025 = vrot.lane.b32.xlu0 %v1018, 78
      %v1026 = vpop.permute.xlu0 %1025
      %1029 = vrot.lane.b32.xlu0 %v1019, 103
      %v1030 = vpop.permute.xlu0 %1029
      %v1032 = vsel %vm531, %v1022, %v1026
      %v1033 = vsel %vm533, %v1032, %v1030
      %v1035 = vsel %vm535, %v1033, 0
      %1037 = vmatprep.subr.mxu0 0.0
      %1038 = vmatpush1.msra.mxu0 0.0
      %1039 = vmatprep.subr.mxu0 0.0
      %1040 = vmatpush1.msra.mxu0 0.0
      %1041 = vmatprep.subr.mxu0 0.0
      %1042 = vmatpush1.msra.mxu0 0.0
      %1043 = vmatprep.subr.mxu0 0.0
      %1044 = vmatpush1.msra.mxu0 0.0
      %1045 = vmatprep.subr.mxu0 0.0
      %1046 = vmatpush1.msra.mxu0 0.0
      %1047 = vmatprep.subr.mxu0 0.0
      %1048 = vmatpush1.msra.mxu0 0.0
      %1049 = vmatprep.subr.mxu0 0.0
      %1050 = vmatpush1.msra.mxu0 %v541
      %1051 = vmatprep.subr.mxu0 0.0
      %1052 = vmatpush1.msra.mxu0 %v515
      %1053 = vmatprep.subr.mxu0 0.0
      %1054 = vmatpush1.msra.mxu0 %v514
      %1055 = vmatprep.subr.mxu0 0.0
      %1056 = vmatpush1.msra.mxu0 %v513
      %1057 = vmatprep.subr.mxu0 0.0
      %1058 = vmatpush1.msra.mxu0 %v512
      %1059 = vmatprep.subr.mxu0 0.0
      %1060 = vmatpush1.msra.mxu0 %v511
      %1061 = vmatprep.subr.mxu0 0.0
      %1062 = vmatpush1.msra.mxu0 %v510
      %1063 = vmatprep.subr.mxu0 0.0
      %1064 = vmatpush1.msra.mxu0 %v509
      %1065 = vmatprep.subr.mxu0 0.0
      %1066 = vmatpush1.msra.mxu0 %v508
      %1067 = vmatprep.subr.mxu0 0.0
      %1068 = vmatpush1.msra.mxu0 %v507
      %1069 = vmatprep.subr.mxu0 0.0
      %1070 = vmatpush2.msra.mxu0 0.0
      %1071 = vmatprep.subr.mxu0 0.0
      %1072 = vmatpush2.msra.mxu0 0.0
      %1073 = vmatprep.subr.mxu0 0.0
      %1074 = vmatpush2.msra.mxu0 0.0
      %1075 = vmatprep.subr.mxu0 0.0
      %1076 = vmatpush2.msra.mxu0 0.0
      %1077 = vmatprep.subr.mxu0 0.0
      %1078 = vmatpush2.msra.mxu0 0.0
      %1079 = vmatprep.subr.mxu0 0.0
      %1080 = vmatpush2.msra.mxu0 0.0
      %1081 = vmatprep.subr.mxu0 0.0
      %1082 = vmatpush2.msra.mxu0 0.0
      %1083 = vmatprep.subr.mxu0 0.0
      %1084 = vmatpush2.msra.mxu0 0.0
      %1085 = vmatprep.subr.mxu0 0.0
      %1086 = vmatpush2.msra.mxu0 0.0
      %1087 = vmatprep.subr.mxu0 0.0
      %1088 = vmatpush2.msra.mxu0 0.0
      %1089 = vmatprep.subr.mxu0 0.0
      %1090 = vmatpush2.msra.mxu0 0.0
      %1091 = vmatprep.subr.mxu0 0.0
      %1092 = vmatpush2.msra.mxu0 0.0
      %1093 = vmatprep.subr.mxu0 0.0
      %1094 = vmatpush2.msra.mxu0 0.0
      %1095 = vmatprep.subr.mxu0 0.0
      %1096 = vmatpush2.msra.mxu0 0.0
      %1097 = vmatprep.subr.mxu0 0.0
      %1098 = vmatpush2.msra.mxu0 0.0
      %1099 = vmatprep.subr.mxu0 0.0
      %1100 = vmatpush2.msra.mxu0 0.0
      %1101 = vmatprep.mubr.f32.mxu0 0.0
      %1102 = vmatmul.mubr.f32.gmra.mxu0 %v1035
      %v1103 = vpop.f32.mrf.mxu0
      %v1104 = vadd.f32 0.0, %v1103
      %v1105 = vpop.f32.mrf.mxu0
      %1106 = vdwg.mxu0
      %v1107 = vmul.f32 %v1104, %v616
      %v1108 = vadd.f32 %v1107, %v622
      %1110 = vrot.lane.b32.xlu0 %v1016, 53
      %v1111 = vpop.permute.xlu0 %1110
      %v1113 = vadd.f32 %v1108, %v1111
      %v1114 = vmax.f32 %v1113, 0.0
      %v1116 = vcombine.high %v1114, %v1114
      %v1118 = vunpack.c.l.s4 1966171168
      %v1119 = vunpack.c.0.s8 %v1118
      %v1120 = vlaneseq
      %v1121 = vshrl.u32 %v1120, 7
      %v1122 = vsub.s32 %v1119, %v1121
      %v1123 = vrot.slane %v1114, %v1122
      %v1125 = vunpack.c.l.s4 1966171168
      %v1126 = vunpack.c.0.s8 %v1125
      %v1127 = vlaneseq
      %v1128 = vshrl.u32 %v1127, 7
      %v1129 = vsub.s32 %v1126, %v1128
      %v1130 = vrot.slane %v1116, %v1129
      %v1131 = vcombine.high %v1123, %v1123
      %v1132 = vcombine.high %v1130, %v1130
      %v1134 = vunpack.c.l.s4 1966171168
      %v1135 = vunpack.c.0.s8 %v1134
      %v1136 = vlaneseq
      %v1137 = vshrl.u32 %v1136, 7
      %v1138 = vsub.s32 %v1135, %v1137
      %v1139 = vrot.slane %v1123, %v1138
      %v1141 = vunpack.c.l.s4 1966171168
      %v1142 = vunpack.c.0.s8 %v1141
      %v1143 = vlaneseq
      %v1144 = vshrl.u32 %v1143, 7
      %v1145 = vsub.s32 %v1142, %v1144
      %v1146 = vrot.slane %v1130, %v1145
      %v1148 = vunpack.c.l.s4 1966171168
      %v1149 = vunpack.c.0.s8 %v1148
      %v1150 = vlaneseq
      %v1151 = vshrl.u32 %v1150, 7
      %v1152 = vsub.s32 %v1149, %v1151
      %v1153 = vrot.slane %v1131, %v1152
      %v1155 = vunpack.c.l.s4 1966171168
      %v1156 = vunpack.c.0.s8 %v1155
      %v1157 = vlaneseq
      %v1158 = vshrl.u32 %v1157, 7
      %v1159 = vsub.s32 %v1156, %v1158
      %v1160 = vrot.slane %v1132, %v1159
      %v1161 = vcombine.high %v1139, %v1139
      %v1162 = vcombine.high %v1146, %v1146
      %v1163 = vcombine.high %v1153, %v1153
      %v1164 = vcombine.high %v1160, %v1160
      %1173 = vst.msk [vmem:[%s355 + $0x3] sm:$0x1] %vm685, %v1139
      %1174 = vst.msk [vmem:[%s355 + $0xb] sm:$0x1] %vm685, %v1153
      %1175 = vst.msk [vmem:[%s355 + $0x13] sm:$0x1] %vm685, %v1161
      %1176 = vst.msk [vmem:[%s355 + $0x1b] sm:$0x1] %vm685, %v1163
      %1177 = vst.msk [vmem:[%s355 + $0x23] sm:$0x1] %vm685, %v1146
      %1178 = vst.msk [vmem:[%s355 + $0x2b] sm:$0x1] %vm685, %v1160
      %1179 = vst.msk [vmem:[%s355 + $0x33] sm:$0x1] %vm685, %v1162
      %1180 = vst.msk [vmem:[%s355 + $0x3b] sm:$0x1] %vm685, %v1164
      %v1181 = vld [vmem:[#allocation2] sm:$0xff]
      %v1182 = vld [vmem:[#allocation2 + $0x10] sm:$0xff]
      %v1183 = vld [vmem:[#allocation2 + $0x20] sm:$0xff]
      %v1184 = vld [vmem:[#allocation2 + $0x30] sm:$0xff]
      %1186 = vrot.lane.b32.xlu0 %v1182, 28
      %v1187 = vpop.permute.xlu0 %1186
      %1190 = vrot.lane.b32.xlu0 %v1183, 53
      %v1191 = vpop.permute.xlu0 %1190
      %1194 = vrot.lane.b32.xlu0 %v1184, 78
      %v1195 = vpop.permute.xlu0 %1194
      %v1197 = vsel %vm531, %v1187, %v1191
      %v1198 = vsel %vm533, %v1197, %v1195
      %v1200 = vsel %vm535, %v1198, 0
      %1202 = vmatprep.subr.mxu0 0.0
      %1203 = vmatpush1.msra.mxu0 0.0
      %1204 = vmatprep.subr.mxu0 0.0
      %1205 = vmatpush1.msra.mxu0 0.0
      %1206 = vmatprep.subr.mxu0 0.0
      %1207 = vmatpush1.msra.mxu0 0.0
      %1208 = vmatprep.subr.mxu0 0.0
      %1209 = vmatpush1.msra.mxu0 0.0
      %1210 = vmatprep.subr.mxu0 0.0
      %1211 = vmatpush1.msra.mxu0 0.0
      %1212 = vmatprep.subr.mxu0 0.0
      %1213 = vmatpush1.msra.mxu0 0.0
      %1214 = vmatprep.subr.mxu0 0.0
      %1215 = vmatpush1.msra.mxu0 %v541
      %1216 = vmatprep.subr.mxu0 0.0
      %1217 = vmatpush1.msra.mxu0 %v515
      %1218 = vmatprep.subr.mxu0 0.0
      %1219 = vmatpush1.msra.mxu0 %v514
      %1220 = vmatprep.subr.mxu0 0.0
      %1221 = vmatpush1.msra.mxu0 %v513
      %1222 = vmatprep.subr.mxu0 0.0
      %1223 = vmatpush1.msra.mxu0 %v512
      %1224 = vmatprep.subr.mxu0 0.0
      %1225 = vmatpush1.msra.mxu0 %v511
      %1226 = vmatprep.subr.mxu0 0.0
      %1227 = vmatpush1.msra.mxu0 %v510
      %1228 = vmatprep.subr.mxu0 0.0
      %1229 = vmatpush1.msra.mxu0 %v509
      %1230 = vmatprep.subr.mxu0 0.0
      %1231 = vmatpush1.msra.mxu0 %v508
      %1232 = vmatprep.subr.mxu0 0.0
      %1233 = vmatpush1.msra.mxu0 %v507
      %1234 = vmatprep.subr.mxu0 0.0
      %1235 = vmatpush2.msra.mxu0 0.0
      %1236 = vmatprep.subr.mxu0 0.0
      %1237 = vmatpush2.msra.mxu0 0.0
      %1238 = vmatprep.subr.mxu0 0.0
      %1239 = vmatpush2.msra.mxu0 0.0
      %1240 = vmatprep.subr.mxu0 0.0
      %1241 = vmatpush2.msra.mxu0 0.0
      %1242 = vmatprep.subr.mxu0 0.0
      %1243 = vmatpush2.msra.mxu0 0.0
      %1244 = vmatprep.subr.mxu0 0.0
      %1245 = vmatpush2.msra.mxu0 0.0
      %1246 = vmatprep.subr.mxu0 0.0
      %1247 = vmatpush2.msra.mxu0 0.0
      %1248 = vmatprep.subr.mxu0 0.0
      %1249 = vmatpush2.msra.mxu0 0.0
      %1250 = vmatprep.subr.mxu0 0.0
      %1251 = vmatpush2.msra.mxu0 0.0
      %1252 = vmatprep.subr.mxu0 0.0
      %1253 = vmatpush2.msra.mxu0 0.0
      %1254 = vmatprep.subr.mxu0 0.0
      %1255 = vmatpush2.msra.mxu0 0.0
      %1256 = vmatprep.subr.mxu0 0.0
      %1257 = vmatpush2.msra.mxu0 0.0
      %1258 = vmatprep.subr.mxu0 0.0
      %1259 = vmatpush2.msra.mxu0 0.0
      %1260 = vmatprep.subr.mxu0 0.0
      %1261 = vmatpush2.msra.mxu0 0.0
      %1262 = vmatprep.subr.mxu0 0.0
      %1263 = vmatpush2.msra.mxu0 0.0
      %1264 = vmatprep.subr.mxu0 0.0
      %1265 = vmatpush2.msra.mxu0 0.0
      %1266 = vmatprep.mubr.f32.mxu0 0.0
      %1267 = vmatmul.mubr.f32.gmra.mxu0 %v1200
      %v1268 = vpop.f32.mrf.mxu0
      %v1269 = vadd.f32 0.0, %v1268
      %v1270 = vpop.f32.mrf.mxu0
      %1271 = vdwg.mxu0
      %v1272 = vmul.f32 %v1269, %v616
      %v1273 = vadd.f32 %v1272, %v622
      %1275 = vrot.lane.b32.xlu0 %v1181, 28
      %v1276 = vpop.permute.xlu0 %1275
      %v1278 = vadd.f32 %v1273, %v1276
      %v1279 = vmax.f32 %v1278, 0.0
      %v1281 = vcombine.high %v1279, %v1279
      %v1283 = vunpack.c.l.s4 1966171168
      %v1284 = vunpack.c.0.s8 %v1283
      %v1285 = vlaneseq
      %v1286 = vshrl.u32 %v1285, 7
      %v1287 = vsub.s32 %v1284, %v1286
      %v1288 = vrot.slane %v1279, %v1287
      %v1290 = vunpack.c.l.s4 1966171168
      %v1291 = vunpack.c.0.s8 %v1290
      %v1292 = vlaneseq
      %v1293 = vshrl.u32 %v1292, 7
      %v1294 = vsub.s32 %v1291, %v1293
      %v1295 = vrot.slane %v1281, %v1294
      %v1296 = vcombine.high %v1288, %v1288
      %v1297 = vcombine.high %v1295, %v1295
      %v1299 = vunpack.c.l.s4 1966171168
      %v1300 = vunpack.c.0.s8 %v1299
      %v1301 = vlaneseq
      %v1302 = vshrl.u32 %v1301, 7
      %v1303 = vsub.s32 %v1300, %v1302
      %v1304 = vrot.slane %v1288, %v1303
      %v1306 = vunpack.c.l.s4 1966171168
      %v1307 = vunpack.c.0.s8 %v1306
      %v1308 = vlaneseq
      %v1309 = vshrl.u32 %v1308, 7
      %v1310 = vsub.s32 %v1307, %v1309
      %v1311 = vrot.slane %v1295, %v1310
      %v1313 = vunpack.c.l.s4 1966171168
      %v1314 = vunpack.c.0.s8 %v1313
      %v1315 = vlaneseq
      %v1316 = vshrl.u32 %v1315, 7
      %v1317 = vsub.s32 %v1314, %v1316
      %v1318 = vrot.slane %v1296, %v1317
      %v1320 = vunpack.c.l.s4 1966171168
      %v1321 = vunpack.c.0.s8 %v1320
      %v1322 = vlaneseq
      %v1323 = vshrl.u32 %v1322, 7
      %v1324 = vsub.s32 %v1321, %v1323
      %v1325 = vrot.slane %v1297, %v1324
      %v1326 = vcombine.high %v1304, %v1304
      %v1327 = vcombine.high %v1311, %v1311
      %v1328 = vcombine.high %v1318, %v1318
      %v1329 = vcombine.high %v1325, %v1325
      %1338 = vst.msk [vmem:[%s355 + $0x4] sm:$0x1] %vm685, %v1304
      %1339 = vst.msk [vmem:[%s355 + $0xc] sm:$0x1] %vm685, %v1318
      %1340 = vst.msk [vmem:[%s355 + $0x14] sm:$0x1] %vm685, %v1326
      %1341 = vst.msk [vmem:[%s355 + $0x1c] sm:$0x1] %vm685, %v1328
      %1342 = vst.msk [vmem:[%s355 + $0x24] sm:$0x1] %vm685, %v1311
      %1343 = vst.msk [vmem:[%s355 + $0x2c] sm:$0x1] %vm685, %v1325
      %1344 = vst.msk [vmem:[%s355 + $0x34] sm:$0x1] %vm685, %v1327
      %1345 = vst.msk [vmem:[%s355 + $0x3c] sm:$0x1] %vm685, %v1329
      %v1346 = vld [vmem:[#allocation2] sm:$0xff]
      %v1347 = vld [vmem:[#allocation2 + $0x8] sm:$0xff]
      %v1348 = vld [vmem:[#allocation2 + $0x10] sm:$0xff]
      %v1349 = vld [vmem:[#allocation2 + $0x18] sm:$0xff]
      %v1350 = vld [vmem:[#allocation2 + $0x20] sm:$0xff]
      %v1351 = vld [vmem:[#allocation2 + $0x28] sm:$0xff]
      %v1352 = vld [vmem:[#allocation2 + $0x30] sm:$0xff]
      %v1353 = vld [vmem:[#allocation2 + $0x38] sm:$0xff]
      %1356 = vrot.lane.b32.xlu0 %v1348, 3
      %v1357 = vpop.permute.xlu0 %1356
      %1358 = vrot.lane.b32.xlu0 %v1349, 3
      %v1359 = vpop.permute.xlu0 %1358
      %vm1360 = vcmask 23552
      %v1361 = vsel %vm1360, %v1357, %v1359
      %1365 = vrot.lane.b32.xlu0 %v1350, 28
      %v1366 = vpop.permute.xlu0 %1365
      %1367 = vrot.lane.b32.xlu0 %v1351, 28
      %v1368 = vpop.permute.xlu0 %1367
      %vm1369 = vcmask 228352
      %v1370 = vsel %vm1369, %v1366, %v1368
      %1374 = vrot.lane.b32.xlu0 %v1352, 53
      %v1375 = vpop.permute.xlu0 %1374
      %1376 = vrot.lane.b32.xlu0 %v1353, 53
      %v1377 = vpop.permute.xlu0 %1376
      %vm1378 = vcmask 433152
      %v1379 = vsel %vm1378, %v1375, %v1377
      %v1381 = vsel %vm531, %v1361, %v1370
      %v1382 = vsel %vm533, %v1381, %v1379
      %v1384 = vsel %vm535, %v1382, 0
      %1386 = vmatprep.subr.mxu0 0.0
      %1387 = vmatpush1.msra.mxu0 0.0
      %1388 = vmatprep.subr.mxu0 0.0
      %1389 = vmatpush1.msra.mxu0 0.0
      %1390 = vmatprep.subr.mxu0 0.0
      %1391 = vmatpush1.msra.mxu0 0.0
      %1392 = vmatprep.subr.mxu0 0.0
      %1393 = vmatpush1.msra.mxu0 0.0
      %1394 = vmatprep.subr.mxu0 0.0
      %1395 = vmatpush1.msra.mxu0 0.0
      %1396 = vmatprep.subr.mxu0 0.0
      %1397 = vmatpush1.msra.mxu0 0.0
      %1398 = vmatprep.subr.mxu0 0.0
      %1399 = vmatpush1.msra.mxu0 %v541
      %1400 = vmatprep.subr.mxu0 0.0
      %1401 = vmatpush1.msra.mxu0 %v515
      %1402 = vmatprep.subr.mxu0 0.0
      %1403 = vmatpush1.msra.mxu0 %v514
      %1404 = vmatprep.subr.mxu0 0.0
      %1405 = vmatpush1.msra.mxu0 %v513
      %1406 = vmatprep.subr.mxu0 0.0
      %1407 = vmatpush1.msra.mxu0 %v512
      %1408 = vmatprep.subr.mxu0 0.0
      %1409 = vmatpush1.msra.mxu0 %v511
      %1410 = vmatprep.subr.mxu0 0.0
      %1411 = vmatpush1.msra.mxu0 %v510
      %1412 = vmatprep.subr.mxu0 0.0
      %1413 = vmatpush1.msra.mxu0 %v509
      %1414 = vmatprep.subr.mxu0 0.0
      %1415 = vmatpush1.msra.mxu0 %v508
      %1416 = vmatprep.subr.mxu0 0.0
      %1417 = vmatpush1.msra.mxu0 %v507
      %1418 = vmatprep.subr.mxu0 0.0
      %1419 = vmatpush2.msra.mxu0 0.0
      %1420 = vmatprep.subr.mxu0 0.0
      %1421 = vmatpush2.msra.mxu0 0.0
      %1422 = vmatprep.subr.mxu0 0.0
      %1423 = vmatpush2.msra.mxu0 0.0
      %1424 = vmatprep.subr.mxu0 0.0
      %1425 = vmatpush2.msra.mxu0 0.0
      %1426 = vmatprep.subr.mxu0 0.0
      %1427 = vmatpush2.msra.mxu0 0.0
      %1428 = vmatprep.subr.mxu0 0.0
      %1429 = vmatpush2.msra.mxu0 0.0
      %1430 = vmatprep.subr.mxu0 0.0
      %1431 = vmatpush2.msra.mxu0 0.0
      %1432 = vmatprep.subr.mxu0 0.0
      %1433 = vmatpush2.msra.mxu0 0.0
      %1434 = vmatprep.subr.mxu0 0.0
      %1435 = vmatpush2.msra.mxu0 0.0
      %1436 = vmatprep.subr.mxu0 0.0
      %1437 = vmatpush2.msra.mxu0 0.0
      %1438 = vmatprep.subr.mxu0 0.0
      %1439 = vmatpush2.msra.mxu0 0.0
      %1440 = vmatprep.subr.mxu0 0.0
      %1441 = vmatpush2.msra.mxu0 0.0
      %1442 = vmatprep.subr.mxu0 0.0
      %1443 = vmatpush2.msra.mxu0 0.0
      %1444 = vmatprep.subr.mxu0 0.0
      %1445 = vmatpush2.msra.mxu0 0.0
      %1446 = vmatprep.subr.mxu0 0.0
      %1447 = vmatpush2.msra.mxu0 0.0
      %1448 = vmatprep.subr.mxu0 0.0
      %1449 = vmatpush2.msra.mxu0 0.0
      %1450 = vmatprep.mubr.f32.mxu0 0.0
      %1451 = vmatmul.mubr.f32.gmra.mxu0 %v1384
      %v1452 = vpop.f32.mrf.mxu0
      %v1453 = vadd.f32 0.0, %v1452
      %v1454 = vpop.f32.mrf.mxu0
      %1455 = vdwg.mxu0
      %v1456 = vmul.f32 %v1453, %v616
      %v1457 = vadd.f32 %v1456, %v622
      %1460 = vrot.lane.b32.xlu0 %v1346, 3
      %v1461 = vpop.permute.xlu0 %1460
      %1462 = vrot.lane.b32.xlu0 %v1347, 3
      %v1463 = vpop.permute.xlu0 %1462
      %v1464 = vsel %vm1360, %v1461, %v1463
      %v1466 = vadd.f32 %v1457, %v1464
      %v1467 = vmax.f32 %v1466, 0.0
      %v1469 = vcombine.high %v1467, %v1467
      %v1471 = vunpack.c.l.s4 1966171168
      %v1472 = vunpack.c.0.s8 %v1471
      %v1473 = vlaneseq
      %v1474 = vshrl.u32 %v1473, 7
      %v1475 = vsub.s32 %v1472, %v1474
      %v1476 = vrot.slane %v1467, %v1475
      %v1478 = vunpack.c.l.s4 1966171168
      %v1479 = vunpack.c.0.s8 %v1478
      %v1480 = vlaneseq
      %v1481 = vshrl.u32 %v1480, 7
      %v1482 = vsub.s32 %v1479, %v1481
      %v1483 = vrot.slane %v1469, %v1482
      %v1484 = vcombine.high %v1476, %v1476
      %v1485 = vcombine.high %v1483, %v1483
      %v1487 = vunpack.c.l.s4 1966171168
      %v1488 = vunpack.c.0.s8 %v1487
      %v1489 = vlaneseq
      %v1490 = vshrl.u32 %v1489, 7
      %v1491 = vsub.s32 %v1488, %v1490
      %v1492 = vrot.slane %v1476, %v1491
      %v1494 = vunpack.c.l.s4 1966171168
      %v1495 = vunpack.c.0.s8 %v1494
      %v1496 = vlaneseq
      %v1497 = vshrl.u32 %v1496, 7
      %v1498 = vsub.s32 %v1495, %v1497
      %v1499 = vrot.slane %v1483, %v1498
      %v1501 = vunpack.c.l.s4 1966171168
      %v1502 = vunpack.c.0.s8 %v1501
      %v1503 = vlaneseq
      %v1504 = vshrl.u32 %v1503, 7
      %v1505 = vsub.s32 %v1502, %v1504
      %v1506 = vrot.slane %v1484, %v1505
      %v1508 = vunpack.c.l.s4 1966171168
      %v1509 = vunpack.c.0.s8 %v1508
      %v1510 = vlaneseq
      %v1511 = vshrl.u32 %v1510, 7
      %v1512 = vsub.s32 %v1509, %v1511
      %v1513 = vrot.slane %v1485, %v1512
      %v1514 = vcombine.high %v1492, %v1492
      %v1515 = vcombine.high %v1499, %v1499
      %v1516 = vcombine.high %v1506, %v1506
      %v1517 = vcombine.high %v1513, %v1513
      %1526 = vst.msk [vmem:[%s355 + $0x5] sm:$0x1] %vm685, %v1492
      %1527 = vst.msk [vmem:[%s355 + $0xd] sm:$0x1] %vm685, %v1506
      %1528 = vst.msk [vmem:[%s355 + $0x15] sm:$0x1] %vm685, %v1514
      %1529 = vst.msk [vmem:[%s355 + $0x1d] sm:$0x1] %vm685, %v1516
      %1530 = vst.msk [vmem:[%s355 + $0x25] sm:$0x1] %vm685, %v1499
      %1531 = vst.msk [vmem:[%s355 + $0x2d] sm:$0x1] %vm685, %v1513
      %1532 = vst.msk [vmem:[%s355 + $0x35] sm:$0x1] %vm685, %v1515
      %1533 = vst.msk [vmem:[%s355 + $0x3d] sm:$0x1] %vm685, %v1517
      %v1534 = vld [vmem:[#allocation2 + $0x8] sm:$0xff]
      %v1535 = vld [vmem:[#allocation2 + $0x18] sm:$0xff]
      %v1536 = vld [vmem:[#allocation2 + $0x28] sm:$0xff]
      %v1537 = vld [vmem:[#allocation2 + $0x38] sm:$0xff]
      %1539 = vrot.lane.b32.xlu0 %v1535, 106
      %v1540 = vpop.permute.xlu0 %1539
      %1543 = vrot.lane.b32.xlu0 %v1536, 3
      %v1544 = vpop.permute.xlu0 %1543
      %1547 = vrot.lane.b32.xlu0 %v1537, 28
      %v1548 = vpop.permute.xlu0 %1547
      %v1550 = vsel %vm531, %v1540, %v1544
      %v1551 = vsel %vm533, %v1550, %v1548
      %v1553 = vsel %vm535, %v1551, 0
      %1555 = vmatprep.subr.mxu0 0.0
      %1556 = vmatpush1.msra.mxu0 0.0
      %1557 = vmatprep.subr.mxu0 0.0
      %1558 = vmatpush1.msra.mxu0 0.0
      %1559 = vmatprep.subr.mxu0 0.0
      %1560 = vmatpush1.msra.mxu0 0.0
      %1561 = vmatprep.subr.mxu0 0.0
      %1562 = vmatpush1.msra.mxu0 0.0
      %1563 = vmatprep.subr.mxu0 0.0
      %1564 = vmatpush1.msra.mxu0 0.0
      %1565 = vmatprep.subr.mxu0 0.0
      %1566 = vmatpush1.msra.mxu0 0.0
      %1567 = vmatprep.subr.mxu0 0.0
      %1568 = vmatpush1.msra.mxu0 %v541
      %1569 = vmatprep.subr.mxu0 0.0
      %1570 = vmatpush1.msra.mxu0 %v515
      %1571 = vmatprep.subr.mxu0 0.0
      %1572 = vmatpush1.msra.mxu0 %v514
      %1573 = vmatprep.subr.mxu0 0.0
      %1574 = vmatpush1.msra.mxu0 %v513
      %1575 = vmatprep.subr.mxu0 0.0
      %1576 = vmatpush1.msra.mxu0 %v512
      %1577 = vmatprep.subr.mxu0 0.0
      %1578 = vmatpush1.msra.mxu0 %v511
      %1579 = vmatprep.subr.mxu0 0.0
      %1580 = vmatpush1.msra.mxu0 %v510
      %1581 = vmatprep.subr.mxu0 0.0
      %1582 = vmatpush1.msra.mxu0 %v509
      %1583 = vmatprep.subr.mxu0 0.0
      %1584 = vmatpush1.msra.mxu0 %v508
      %1585 = vmatprep.subr.mxu0 0.0
      %1586 = vmatpush1.msra.mxu0 %v507
      %1587 = vmatprep.subr.mxu0 0.0
      %1588 = vmatpush2.msra.mxu0 0.0
      %1589 = vmatprep.subr.mxu0 0.0
      %1590 = vmatpush2.msra.mxu0 0.0
      %1591 = vmatprep.subr.mxu0 0.0
      %1592 = vmatpush2.msra.mxu0 0.0
      %1593 = vmatprep.subr.mxu0 0.0
      %1594 = vmatpush2.msra.mxu0 0.0
      %1595 = vmatprep.subr.mxu0 0.0
      %1596 = vmatpush2.msra.mxu0 0.0
      %1597 = vmatprep.subr.mxu0 0.0
      %1598 = vmatpush2.msra.mxu0 0.0
      %1599 = vmatprep.subr.mxu0 0.0
      %1600 = vmatpush2.msra.mxu0 0.0
      %1601 = vmatprep.subr.mxu0 0.0
      %1602 = vmatpush2.msra.mxu0 0.0
      %1603 = vmatprep.subr.mxu0 0.0
      %1604 = vmatpush2.msra.mxu0 0.0
      %1605 = vmatprep.subr.mxu0 0.0
      %1606 = vmatpush2.msra.mxu0 0.0
      %1607 = vmatprep.subr.mxu0 0.0
      %1608 = vmatpush2.msra.mxu0 0.0
      %1609 = vmatprep.subr.mxu0 0.0
      %1610 = vmatpush2.msra.mxu0 0.0
      %1611 = vmatprep.subr.mxu0 0.0
      %1612 = vmatpush2.msra.mxu0 0.0
      %1613 = vmatprep.subr.mxu0 0.0
      %1614 = vmatpush2.msra.mxu0 0.0
      %1615 = vmatprep.subr.mxu0 0.0
      %1616 = vmatpush2.msra.mxu0 0.0
      %1617 = vmatprep.subr.mxu0 0.0
      %1618 = vmatpush2.msra.mxu0 0.0
      %1619 = vmatprep.mubr.f32.mxu0 0.0
      %1620 = vmatmul.mubr.f32.gmra.mxu0 %v1553
      %v1621 = vpop.f32.mrf.mxu0
      %v1622 = vadd.f32 0.0, %v1621
      %v1623 = vpop.f32.mrf.mxu0
      %1624 = vdwg.mxu0
      %v1625 = vmul.f32 %v1622, %v616
      %v1626 = vadd.f32 %v1625, %v622
      %1628 = vrot.lane.b32.xlu0 %v1534, 106
      %v1629 = vpop.permute.xlu0 %1628
      %v1631 = vadd.f32 %v1626, %v1629
      %v1632 = vmax.f32 %v1631, 0.0
      %v1634 = vcombine.high %v1632, %v1632
      %v1636 = vunpack.c.l.s4 1966171168
      %v1637 = vunpack.c.0.s8 %v1636
      %v1638 = vlaneseq
      %v1639 = vshrl.u32 %v1638, 7
      %v1640 = vsub.s32 %v1637, %v1639
      %v1641 = vrot.slane %v1632, %v1640
      %v1643 = vunpack.c.l.s4 1966171168
      %v1644 = vunpack.c.0.s8 %v1643
      %v1645 = vlaneseq
      %v1646 = vshrl.u32 %v1645, 7
      %v1647 = vsub.s32 %v1644, %v1646
      %v1648 = vrot.slane %v1634, %v1647
      %v1649 = vcombine.high %v1641, %v1641
      %v1650 = vcombine.high %v1648, %v1648
      %v1652 = vunpack.c.l.s4 1966171168
      %v1653 = vunpack.c.0.s8 %v1652
      %v1654 = vlaneseq
      %v1655 = vshrl.u32 %v1654, 7
      %v1656 = vsub.s32 %v1653, %v1655
      %v1657 = vrot.slane %v1641, %v1656
      %v1659 = vunpack.c.l.s4 1966171168
      %v1660 = vunpack.c.0.s8 %v1659
      %v1661 = vlaneseq
      %v1662 = vshrl.u32 %v1661, 7
      %v1663 = vsub.s32 %v1660, %v1662
      %v1664 = vrot.slane %v1648, %v1663
      %v1666 = vunpack.c.l.s4 1966171168
      %v1667 = vunpack.c.0.s8 %v1666
      %v1668 = vlaneseq
      %v1669 = vshrl.u32 %v1668, 7
      %v1670 = vsub.s32 %v1667, %v1669
      %v1671 = vrot.slane %v1649, %v1670
      %v1673 = vunpack.c.l.s4 1966171168
      %v1674 = vunpack.c.0.s8 %v1673
      %v1675 = vlaneseq
      %v1676 = vshrl.u32 %v1675, 7
      %v1677 = vsub.s32 %v1674, %v1676
      %v1678 = vrot.slane %v1650, %v1677
      %v1679 = vcombine.high %v1657, %v1657
      %v1680 = vcombine.high %v1664, %v1664
      %v1681 = vcombine.high %v1671, %v1671
      %v1682 = vcombine.high %v1678, %v1678
      %1691 = vst.msk [vmem:[%s355 + $0x6] sm:$0x1] %vm685, %v1657
      %1692 = vst.msk [vmem:[%s355 + $0xe] sm:$0x1] %vm685, %v1671
      %1693 = vst.msk [vmem:[%s355 + $0x16] sm:$0x1] %vm685, %v1679
      %1694 = vst.msk [vmem:[%s355 + $0x1e] sm:$0x1] %vm685, %v1681
      %1695 = vst.msk [vmem:[%s355 + $0x26] sm:$0x1] %vm685, %v1664
      %1696 = vst.msk [vmem:[%s355 + $0x2e] sm:$0x1] %vm685, %v1678
      %1697 = vst.msk [vmem:[%s355 + $0x36] sm:$0x1] %vm685, %v1680
      %1698 = vst.msk [vmem:[%s355 + $0x3e] sm:$0x1] %vm685, %v1682
      %v1699 = vld [vmem:[#allocation2 + $0x8] sm:$0xff]
      %v1700 = vld [vmem:[#allocation2 + $0x18] sm:$0xff]
      %v1701 = vld [vmem:[#allocation2 + $0x28] sm:$0xff]
      %v1702 = vld [vmem:[#allocation2 + $0x38] sm:$0xff]
      %1704 = vrot.lane.b32.xlu0 %v1700, 81
      %v1705 = vpop.permute.xlu0 %1704
      %1708 = vrot.lane.b32.xlu0 %v1701, 106
      %v1709 = vpop.permute.xlu0 %1708
      %1712 = vrot.lane.b32.xlu0 %v1702, 3
      %v1713 = vpop.permute.xlu0 %1712
      %v1715 = vsel %vm531, %v1705, %v1709
      %v1716 = vsel %vm533, %v1715, %v1713
      %v1718 = vsel %vm535, %v1716, 0
      %1720 = vmatprep.subr.mxu0 0.0
      %1721 = vmatpush1.msra.mxu0 0.0
      %1722 = vmatprep.subr.mxu0 0.0
      %1723 = vmatpush1.msra.mxu0 0.0
      %1724 = vmatprep.subr.mxu0 0.0
      %1725 = vmatpush1.msra.mxu0 0.0
      %1726 = vmatprep.subr.mxu0 0.0
      %1727 = vmatpush1.msra.mxu0 0.0
      %1728 = vmatprep.subr.mxu0 0.0
      %1729 = vmatpush1.msra.mxu0 0.0
      %1730 = vmatprep.subr.mxu0 0.0
      %1731 = vmatpush1.msra.mxu0 0.0
      %1732 = vmatprep.subr.mxu0 0.0
      %1733 = vmatpush1.msra.mxu0 %v541
      %1734 = vmatprep.subr.mxu0 0.0
      %1735 = vmatpush1.msra.mxu0 %v515
      %1736 = vmatprep.subr.mxu0 0.0
      %1737 = vmatpush1.msra.mxu0 %v514
      %1738 = vmatprep.subr.mxu0 0.0
      %1739 = vmatpush1.msra.mxu0 %v513
      %1740 = vmatprep.subr.mxu0 0.0
      %1741 = vmatpush1.msra.mxu0 %v512
      %1742 = vmatprep.subr.mxu0 0.0
      %1743 = vmatpush1.msra.mxu0 %v511
      %1744 = vmatprep.subr.mxu0 0.0
      %1745 = vmatpush1.msra.mxu0 %v510
      %1746 = vmatprep.subr.mxu0 0.0
      %1747 = vmatpush1.msra.mxu0 %v509
      %1748 = vmatprep.subr.mxu0 0.0
      %1749 = vmatpush1.msra.mxu0 %v508
      %1750 = vmatprep.subr.mxu0 0.0
      %1751 = vmatpush1.msra.mxu0 %v507
      %1752 = vmatprep.subr.mxu0 0.0
      %1753 = vmatpush2.msra.mxu0 0.0
      %1754 = vmatprep.subr.mxu0 0.0
      %1755 = vmatpush2.msra.mxu0 0.0
      %1756 = vmatprep.subr.mxu0 0.0
      %1757 = vmatpush2.msra.mxu0 0.0
      %1758 = vmatprep.subr.mxu0 0.0
      %1759 = vmatpush2.msra.mxu0 0.0
      %1760 = vmatprep.subr.mxu0 0.0
      %1761 = vmatpush2.msra.mxu0 0.0
      %1762 = vmatprep.subr.mxu0 0.0
      %1763 = vmatpush2.msra.mxu0 0.0
      %1764 = vmatprep.subr.mxu0 0.0
      %1765 = vmatpush2.msra.mxu0 0.0
      %1766 = vmatprep.subr.mxu0 0.0
      %1767 = vmatpush2.msra.mxu0 0.0
      %1768 = vmatprep.subr.mxu0 0.0
      %1769 = vmatpush2.msra.mxu0 0.0
      %1770 = vmatprep.subr.mxu0 0.0
      %1771 = vmatpush2.msra.mxu0 0.0
      %1772 = vmatprep.subr.mxu0 0.0
      %1773 = vmatpush2.msra.mxu0 0.0
      %1774 = vmatprep.subr.mxu0 0.0
      %1775 = vmatpush2.msra.mxu0 0.0
      %1776 = vmatprep.subr.mxu0 0.0
      %1777 = vmatpush2.msra.mxu0 0.0
      %1778 = vmatprep.subr.mxu0 0.0
      %1779 = vmatpush2.msra.mxu0 0.0
      %1780 = vmatprep.subr.mxu0 0.0
      %1781 = vmatpush2.msra.mxu0 0.0
      %1782 = vmatprep.subr.mxu0 0.0
      %1783 = vmatpush2.msra.mxu0 0.0
      %1784 = vmatprep.mubr.f32.mxu0 0.0
      %1785 = vmatmul.mubr.f32.gmra.mxu0 %v1718
      %v1786 = vpop.f32.mrf.mxu0
      %v1787 = vadd.f32 0.0, %v1786
      %v1788 = vpop.f32.mrf.mxu0
      %1789 = vdwg.mxu0
      %v1790 = vmul.f32 %v1787, %v616
      %v1791 = vadd.f32 %v1790, %v622
      %1793 = vrot.lane.b32.xlu0 %v1699, 81
      %v1794 = vpop.permute.xlu0 %1793
      %v1796 = vadd.f32 %v1791, %v1794
      %v1797 = vmax.f32 %v1796, 0.0
      %v1799 = vcombine.high %v1797, %v1797
      %v1801 = vunpack.c.l.s4 1966171168
      %v1802 = vunpack.c.0.s8 %v1801
      %v1803 = vlaneseq
      %v1804 = vshrl.u32 %v1803, 7
      %v1805 = vsub.s32 %v1802, %v1804
      %v1806 = vrot.slane %v1797, %v1805
      %v1808 = vunpack.c.l.s4 1966171168
      %v1809 = vunpack.c.0.s8 %v1808
      %v1810 = vlaneseq
      %v1811 = vshrl.u32 %v1810, 7
      %v1812 = vsub.s32 %v1809, %v1811
      %v1813 = vrot.slane %v1799, %v1812
      %v1814 = vcombine.high %v1806, %v1806
      %v1815 = vcombine.high %v1813, %v1813
      %v1817 = vunpack.c.l.s4 1966171168
      %v1818 = vunpack.c.0.s8 %v1817
      %v1819 = vlaneseq
      %v1820 = vshrl.u32 %v1819, 7
      %v1821 = vsub.s32 %v1818, %v1820
      %v1822 = vrot.slane %v1806, %v1821
      %v1824 = vunpack.c.l.s4 1966171168
      %v1825 = vunpack.c.0.s8 %v1824
      %v1826 = vlaneseq
      %v1827 = vshrl.u32 %v1826, 7
      %v1828 = vsub.s32 %v1825, %v1827
      %v1829 = vrot.slane %v1813, %v1828
      %v1831 = vunpack.c.l.s4 1966171168
      %v1832 = vunpack.c.0.s8 %v1831
      %v1833 = vlaneseq
      %v1834 = vshrl.u32 %v1833, 7
      %v1835 = vsub.s32 %v1832, %v1834
      %v1836 = vrot.slane %v1814, %v1835
      %v1838 = vunpack.c.l.s4 1966171168
      %v1839 = vunpack.c.0.s8 %v1838
      %v1840 = vlaneseq
      %v1841 = vshrl.u32 %v1840, 7
      %v1842 = vsub.s32 %v1839, %v1841
      %v1843 = vrot.slane %v1815, %v1842
      %v1844 = vcombine.high %v1822, %v1822
      %v1845 = vcombine.high %v1829, %v1829
      %v1846 = vcombine.high %v1836, %v1836
      %v1847 = vcombine.high %v1843, %v1843
      %1856 = vst.msk [vmem:[%s355 + $0x7] sm:$0x1] %vm685, %v1822
      %1857 = vst.msk [vmem:[%s355 + $0xf] sm:$0x1] %vm685, %v1836
      %1858 = vst.msk [vmem:[%s355 + $0x17] sm:$0x1] %vm685, %v1844
      %1859 = vst.msk [vmem:[%s355 + $0x1f] sm:$0x1] %vm685, %v1846
      %1860 = vst.msk [vmem:[%s355 + $0x27] sm:$0x1] %vm685, %v1829
      %1861 = vst.msk [vmem:[%s355 + $0x2f] sm:$0x1] %vm685, %v1843
      %1862 = vst.msk [vmem:[%s355 + $0x37] sm:$0x1] %vm685, %v1845
      %1863 = vst.msk [vmem:[%s355 + $0x3f] sm:$0x1] %vm685, %v1847
      %s1864 = smul.u32 8, %s22
      %p1865 = scmp.lt.s32.totalorder %s21, 1
      %s1866 = scalar_select %p1865, %s21, 1
      %p1867 = scmp.lt.s32.totalorder %s1864, 31
      %s1868 = scalar_select %p1867, %s1864, 31
      %s1869 = smul.addr %s1866, 32
      %s1870 = sadd.s32 %s1868, %s1869
      %s1871 = smul.addr %s1870, 8
      %s1872 = scalar_lea.vmem %s6, %s1871
      // Predicated region
      $region45: #{spatial_mixformer_forward.1} parent=43 // pred_check
        %p1873 = pneg %p199
      $region46: #{spatial_mixformer_forward.1} parent=43 // pred_check_branch
        %1875 = sbr.rel (%p1873) target = $region48
      $region47: #{spatial_mixformer_forward.1} parent=43 // pred_region
        %s1876 = smul.u32 8, %s22
      $region48: #{spatial_mixformer_forward.1} parent=43 // pred_fallthru
        _
    $region44: #{spatial_mixformer_forward.1} parent=5 // pred_fallthru
      _
    %p1877 = scmp.le.s32.totalorder 2, %s12
    // Predicated region
    $region49: #{spatial_mixformer_forward.1} parent=5 // pred_check
      %p1878 = pneg %p1877
    $region50: #{spatial_mixformer_forward.1} parent=5 // pred_check_branch
      %1880 = sbr.rel (%p1878) target = $region52
    $region51: #{spatial_mixformer_forward.1} parent=5 // pred_region
      %s1881 = ssub.s32 %s12, 2
      // Predicated region
      $region53: #{spatial_mixformer_forward.1} parent=51 // pred_check
        %p1882 = pneg %p205
      $region54: #{spatial_mixformer_forward.1} parent=51 // pred_check_branch
        %1884 = sbr.rel (%p1882) target = $region56
      $region55: #{spatial_mixformer_forward.1} parent=51 // pred_region
        %s1885 = smul.u32 8, %s24
        %p1886 = scmp.lt.s32.totalorder %s23, 1
        %s1887 = scalar_select %p1886, %s23, 1
        %p1888 = scmp.lt.s32.totalorder %s1885, 31
        %s1889 = scalar_select %p1888, %s1885, 31
        %s1890 = smul.addr %s1887, 32
        %s1891 = sadd.s32 %s1889, %s1890
        %s1892 = smul.addr %s1891, 8
        %s1893 = scalar_lea.vmem %s6, %s1892
      $region56: #{spatial_mixformer_forward.1} parent=51 // pred_fallthru
        _
    $region52: #{spatial_mixformer_forward.1} parent=5 // pred_fallthru
      _
  $region6: #{spatial_mixformer_forward.1} parent=0 // loop_footer
    %s16 = sadd.s32 1, %s12
  $region7: #{spatial_mixformer_forward.1} parent=0 // loop_footer_branch
    %11 = sbr.rel target = $region3
  $region8: #{spatial_mixformer_forward.1} parent=0 // loop_exit
    _

</llo_original>
